<compile_context>
chip_gen: v7x
topology: tpu7x:2x2x1
jax: 0.10.0
libtpu: 0.0.40
codegen_flags: <defaults>
</compile_context>

<pallas_src>
import functools

import numpy as np
import jax
import jax.numpy as jnp
from jax.experimental import pallas as pl
from jax.experimental.pallas import tpu as pltpu


# ---------------------------------------------------------------------------
# helpers
# ---------------------------------------------------------------------------
def bilinear_matrix(out_size, in_size):
    """Row-interpolation matrix A with out = A @ in (align_corners=False)."""
    A = np.zeros((out_size, in_size), np.float32)
    scale = in_size / out_size
    for o in range(out_size):
        src = max((o + 0.5) * scale - 0.5, 0.0)
        i0 = min(int(np.floor(src)), in_size - 1)
        i1 = min(i0 + 1, in_size - 1)
        w1 = src - i0
        A[o, i0] += 1.0 - w1
        A[o, i1] += w1
    return A
    # TODO(synk): torchvision antialiased *down*-sampling is not reproduced;
    # for upsampling (used here, asserted in prepare_decoder) this is exact.


# ---------------------------------------------------------------------------
# the fused Pallas kernel (single invocation, everything resident in VMEM)
# ---------------------------------------------------------------------------
def _fused_kernel(n_layers, z_ref, nrgb_ref, rgb_ref,
                  wt0_ref, b0_ref, wt1_ref, b1_ref, *refs):
    """refs layout (inputs):
      if n_layers >= 1: [fl0_wz, fl0_we, fl0_b, (fl_w, fl_b) x (n_layers-1),
                         img_wt, img_b, mask_wt3, mask_b3]
      else:             [img_wz, img_we, img_b, mask3_wz, mask3_we, mask_b3]
      then: rt3, rtsel
    followed by the two output refs: img_out, ml_out.
    """
    f32 = jnp.float32

    def mm(x, w):
        # MXU matmul with f32 accumulation; bf16 weight configs run natively.
        return jnp.dot(x.astype(w.dtype), w, preferred_element_type=f32)

    # ---- rgb embedding MLP ----
    h = jnp.maximum(mm(nrgb_ref[...], wt0_ref[...]) + b0_ref[...], 0.0)
    emb = mm(h, wt1_ref[...]) + b1_ref[...]                        # (B, mos)

    # ---- feature extractor + heads (split weights: no lane concatenates) ----
    if n_layers >= 1:
        wz_ref, we_ref, b_ref = refs[0], refs[1], refs[2]
        feats = jnp.maximum(
            mm(z_ref[...], wz_ref[...]) + mm(emb, we_ref[...]) + b_ref[...],
            0.0)
        idx = 3
        for _ in range(1, n_layers):
            w_ref, b_ref = refs[idx], refs[idx + 1]
            idx += 2
            feats = jnp.maximum(mm(feats, w_ref[...]) + b_ref[...], 0.0)
        img_wt_ref, img_b_ref, mwt3_ref, mb3_ref = refs[idx:idx + 4]
        idx += 4
        img = mm(feats, img_wt_ref[...]) + img_b_ref[...]          # (B, 3P)
        ml3 = mm(feats, mwt3_ref[...]) + mb3_ref[...]              # (B, 3P)
    else:
        # Empty feature extractor: heads consume [z | emb] via split weights.
        iwz_ref, iwe_ref, img_b_ref, mwz_ref, mwe_ref, mb3_ref = refs[:6]
        idx = 6
        img = (mm(z_ref[...], iwz_ref[...]) + mm(emb, iwe_ref[...])
               + img_b_ref[...])
        ml3 = (mm(z_ref[...], mwz_ref[...]) + mm(emb, mwe_ref[...])
               + mb3_ref[...])

    rt3_ref, rtsel_ref, img_out_ref, ml_out_ref = refs[idx:]

    # (sigmoid(ml) > 0.5) ? image_head : rgb   ==   single select on ml > 0
    comp = jnp.where(ml3 > 0.0, img, rgb_ref[...].astype(f32))     # (B, 3P)

    # Mask-logit resize via channel-0 selector RTSEL = [RT; 0; 0] and fused
    # 3-channel bilinear resize via block-diagonal RT3 — both lane-dense,
    # no sub-128-lane slices, one matmul each.
    ml_out_ref[...] = mm(ml3, rtsel_ref[...]).astype(ml_out_ref.dtype)
    img_out_ref[...] = mm(comp, rt3_ref[...]).astype(img_out_ref.dtype)


# ---------------------------------------------------------------------------
# one-time parameter preparation (transposes, head replication, resize ops)
# ---------------------------------------------------------------------------
def prepare_decoder(params, *, latent_dims, model_output_image_size,
                    output_image_size, weight_dtype=jnp.float32):
    mos, ois = model_output_image_size, output_image_size
    assert ois >= mos, "bilinear operator only exact for upsampling (no antialias)"
    P, Q = mos * mos, ois * ois

    ah = bilinear_matrix(ois, mos)
    aw = bilinear_matrix(ois, mos)
    # Flattened separable-resize operator: vec(ah @ X @ aw.T) = vec(X) @ RT,
    # RT[h*mos + w, p*ois + q] = ah[p, h] * aw[q, w].   (P, Q)
    rt = np.einsum("ph,qw->hwpq", ah, aw).reshape(P, Q)
    rt3 = np.zeros((3 * P, 3 * Q), np.float32)        # block_diag(RT, RT, RT)
    for c in range(3):
        rt3[c * P:(c + 1) * P, c * Q:(c + 1) * Q] = rt
    rtsel = np.zeros((3 * P, Q), np.float32)          # channel-0 select+resize
    rtsel[:P, :] = rt

    def wt(w):
        return jnp.asarray(np.asarray(w).T, weight_dtype)

    def bias(b):
        return jnp.asarray(np.asarray(b), jnp.float32).reshape(1, -1)

    fls = params["feature_layers"]
    n_layers = len(fls)

    extra = []
    macs = (3 * Q) * P + P * mos            # rgb-embedding MLP
    in_f = latent_dims + mos
    for i, (w, b) in enumerate(fls):
        w = np.asarray(w)
        out_f = w.shape[0]
        macs += in_f * out_f
        if i == 0:
            # split (latent | emb) rows of W.T so the kernel needs no concat
            extra += [jnp.asarray(w[:, :latent_dims].T, weight_dtype),
                      jnp.asarray(w[:, latent_dims:].T, weight_dtype),
                      bias(b)]
        else:
            extra += [wt(w), bias(b)]
        in_f = out_f

    img_w = np.asarray(params["img_w"])       # (3P, in_f)
    img_b = np.asarray(params["img_b"])
    mask_w = np.asarray(params["mask_w"])     # (P, in_f)
    mask_b = np.asarray(params["mask_b"])
    mask_w3 = np.concatenate([mask_w, mask_w, mask_w], axis=0)   # (3P, in_f)
    mask_b3 = np.concatenate([mask_b, mask_b, mask_b], axis=0)   # (3P,)

    if n_layers >= 1:
        extra += [wt(img_w), bias(img_b), wt(mask_w3), bias(mask_b3)]
    else:
        extra += [jnp.asarray(img_w[:, :latent_dims].T, weight_dtype),
                  jnp.asarray(img_w[:, latent_dims:].T, weight_dtype),
                  bias(img_b),
                  jnp.asarray(mask_w3[:, :latent_dims].T, weight_dtype),
                  jnp.asarray(mask_w3[:, latent_dims:].T, weight_dtype),
                  bias(mask_b3)]
    macs += in_f * (3 * P) * 2                  # both heads
    macs += (3 * P) * (3 * Q) + (3 * P) * Q     # both resize matmuls

    extra += [jnp.asarray(rt3, weight_dtype), jnp.asarray(rtsel, weight_dtype)]

    return {"mos": mos, "ois": ois, "latent_dims": latent_dims,
            "n_layers": n_layers, "macs_per_row": int(macs),
            "wt0": wt(params["rgb_emb_w0"]), "b0": bias(params["rgb_emb_b0"]),
            "wt1": wt(params["rgb_emb_w1"]), "b1": bias(params["rgb_emb_b1"]),
            "extra": extra}


# ---------------------------------------------------------------------------
# forward (one pallas_call, no grid, no pipeline buffers)
# ---------------------------------------------------------------------------
def decoder_global_fc_forward(prepared, z, normalized_rgb, rgb):
    B = z.shape[0]
    mos, ois = prepared["mos"], prepared["ois"]
    assert z.shape[1] == prepared["latent_dims"]
    assert normalized_rgb.shape == (B, 3, ois, ois), "normalized_rgb must be at output_image_size"
    assert rgb.shape == (B, 3, mos, mos), "rgb must be at model_output_image_size"

    nrgb_flat = normalized_rgb.reshape(B, -1)   # (B, 3*ois^2) row-major NCHW
    rgb_flat = rgb.reshape(B, -1)               # (B, 3*mos^2) row-major NCHW

    inputs = [z, nrgb_flat, rgb_flat,
              prepared["wt0"], prepared["b0"],
              prepared["wt1"], prepared["b1"],
              *prepared["extra"]]

    out_shape = (jax.ShapeDtypeStruct((B, 3 * ois * ois), jnp.float32),
                 jax.ShapeDtypeStruct((B, ois * ois), jnp.float32))

    # Whole-array VMEM operands: single kernel invocation, no double-buffered
    # pipeline prologue for ~18 tiny resident operands.
    vmem = pl.BlockSpec(memory_space=pltpu.MemorySpace.VMEM)

    flops = 2 * B * prepared["macs_per_row"]
    bytes_accessed = sum(int(np.prod(x.shape)) * np.dtype(x.dtype).itemsize
                         for x in inputs)
    bytes_accessed += sum(int(np.prod(s.shape)) * np.dtype(s.dtype).itemsize
                          for s in out_shape)

    img_flat, ml_flat = pl.pallas_call(
        functools.partial(_fused_kernel, prepared["n_layers"]),
        out_shape=out_shape,
        in_specs=[vmem] * len(inputs),
        out_specs=(vmem, vmem),
        cost_estimate=pl.CostEstimate(flops=int(flops), transcendentals=0,
                                      bytes_accessed=int(bytes_accessed)),
    )(*inputs)

    image = img_flat.reshape(B, 3, ois, ois)
    mask_logits = ml_flat.reshape(B, ois, ois)
    return image, mask_logits


# ---------------------------------------------------------------------------
# deterministic parameter init (PyTorch nn.Linear-like uniform bounds)
# ---------------------------------------------------------------------------
def init_params(key, latent_dims, mos, ois, hdim):
    def lin_init(k, in_f, out_f):
        kw, kb = jax.random.split(k)
        bound = 1.0 / float(np.sqrt(in_f))
        w = jax.random.uniform(kw, (out_f, in_f), jnp.float32, -bound, bound)
        b = jax.random.uniform(kb, (out_f,), jnp.float32, -bound, bound)
        return w, b

    n_feat = len(hdim)
    keys = jax.random.split(key, 4 + n_feat)
    rgb_emb_dims = mos
    p = {}
    p["rgb_emb_w0"], p["rgb_emb_b0"] = lin_init(keys[0], ois * ois * 3,
                                                rgb_emb_dims ** 2)
    p["rgb_emb_w1"], p["rgb_emb_b1"] = lin_init(keys[1], rgb_emb_dims ** 2,
                                                rgb_emb_dims)
    in_f = latent_dims + rgb_emb_dims
    layers = []
    for i, hsz in enumerate(hdim[::-1]):
        w, b = lin_init(keys[2 + i], in_f, hsz)
        layers.append((w, b))
        in_f = hsz
    p["feature_layers"] = layers
    p["img_w"], p["img_b"] = lin_init(keys[2 + n_feat], in_f, mos * mos * 3)
    p["mask_w"], p["mask_b"] = lin_init(keys[3 + n_feat], in_f, mos * mos)
    return p


# ---------------------------------------------------------------------------
# plain-JAX reference (same math, no Pallas) for a correctness check
# ---------------------------------------------------------------------------
def reference_forward(params, z, normalized_rgb, rgb, mos, ois):
    def lin(x, w, b):
        return x @ w.T + b

    B = z.shape[0]
    h = jax.nn.relu(lin(normalized_rgb.reshape(B, -1),
                        params["rgb_emb_w0"], params["rgb_emb_b0"]))
    emb = lin(h, params["rgb_emb_w1"], params["rgb_emb_b1"])
    f = jnp.concatenate([z, emb], axis=1)
    for w, b in params["feature_layers"]:
        f = jax.nn.relu(lin(f, w, b))
    ml = lin(f, params["mask_w"], params["mask_b"]).reshape(B, mos, mos)
    masks = jnp.where(jax.nn.sigmoid(ml) > 0.5, 1.0, 0.0)[:, None]
    img = lin(f, params["img_w"], params["img_b"]).reshape(B, 3, mos, mos)
    img = img * masks + rgb * (1.0 - masks)
    ah = jnp.asarray(bilinear_matrix(ois, mos))
    aw = jnp.asarray(bilinear_matrix(ois, mos))
    ml_r = jnp.einsum("ph,bhw,ow->bpo", ah, ml, aw)
    img_r = jnp.einsum("ph,bchw,ow->bcpo", ah, img, aw)
    return img_r, ml_r


# ---------------------------------------------------------------------------
if __name__ == "__main__":
    latent_dims = 4
    mos = 8        # model_output_image_size
    ois = 16       # output_image_size
    hdim = [32, 16]
    B = 2

    key = jax.random.PRNGKey(0)
    kp, kz, kn, kr = jax.random.split(key, 4)
    params = init_params(kp, latent_dims, mos, ois, hdim)

    # One-time preparation (pre-transposed weights, replicated mask head,
    # block-diagonal resize operators).  weight_dtype=jnp.bfloat16 is the
    # practical production choice for v5e/v6e/v7x MXUs; f32 here so the
    # 1e-4 reference check stays exact.
    prepared = prepare_decoder(params, latent_dims=latent_dims,
                               model_output_image_size=mos,
                               output_image_size=ois,
                               weight_dtype=jnp.float32)

    z = jax.random.normal(kz, (B, latent_dims), jnp.float32)
    normalized_rgb = jax.random.normal(kn, (B, 3, ois, ois), jnp.float32)
    rgb = jax.random.uniform(kr, (B, 3, mos, mos), jnp.float32)

    fwd = jax.jit(lambda zz, nn_, rr: decoder_global_fc_forward(prepared, zz, nn_, rr))
    image, mask_logits = fwd(z, normalized_rgb, rgb)
    image = jax.block_until_ready(image)
    mask_logits = jax.block_until_ready(mask_logits)

    assert image.shape == (B, 3, ois, ois)
    assert mask_logits.shape == (B, ois, ois)

    img_ref, ml_ref = reference_forward(params, z, normalized_rgb, rgb, mos, ois)
    np.testing.assert_allclose(np.asarray(image), np.asarray(img_ref),
                               rtol=1e-4, atol=1e-4)
    np.testing.assert_allclose(np.asarray(mask_logits), np.asarray(ml_ref),
                               rtol=1e-4, atol=1e-4)
    print("KERNEL_OK")
</pallas_src>

<mosaic_0001>
module attributes {stable_mosaic.version = 11 : i64} {
  func.func @_fused_kernel(%arg0: memref<2x4xf32, #tpu.memory_space<vmem>>, %arg1: memref<2x768xf32, #tpu.memory_space<vmem>>, %arg2: memref<2x192xf32, #tpu.memory_space<vmem>>, %arg3: memref<768x64xf32, #tpu.memory_space<vmem>>, %arg4: memref<1x64xf32, #tpu.memory_space<vmem>>, %arg5: memref<64x8xf32, #tpu.memory_space<vmem>>, %arg6: memref<1x8xf32, #tpu.memory_space<vmem>>, %arg7: memref<4x16xf32, #tpu.memory_space<vmem>>, %arg8: memref<8x16xf32, #tpu.memory_space<vmem>>, %arg9: memref<1x16xf32, #tpu.memory_space<vmem>>, %arg10: memref<16x32xf32, #tpu.memory_space<vmem>>, %arg11: memref<1x32xf32, #tpu.memory_space<vmem>>, %arg12: memref<32x192xf32, #tpu.memory_space<vmem>>, %arg13: memref<1x192xf32, #tpu.memory_space<vmem>>, %arg14: memref<32x192xf32, #tpu.memory_space<vmem>>, %arg15: memref<1x192xf32, #tpu.memory_space<vmem>>, %arg16: memref<192x768xf32, #tpu.memory_space<vmem>>, %arg17: memref<192x256xf32, #tpu.memory_space<vmem>>, %arg18: memref<2x768xf32, #tpu.memory_space<vmem>>, %arg19: memref<2x256xf32, #tpu.memory_space<vmem>>) attributes {dimension_semantics = [], scalar_prefetch = 0 : i64, scratch_operands = 0 : i64, tpu.core_type = #tpu.core_type<tc>} {
    %c0 = arith.constant 0 : index
    %c0_0 = arith.constant 0 : index
    %0 = vector.load %arg1[%c0, %c0_0] : memref<2x768xf32, #tpu.memory_space<vmem>>, vector<2x768xf32>
    %c0_1 = arith.constant 0 : index
    %c0_2 = arith.constant 0 : index
    %1 = vector.load %arg3[%c0_1, %c0_2] : memref<768x64xf32, #tpu.memory_space<vmem>>, vector<768x64xf32>
    %cst = arith.constant dense<0.000000e+00> : vector<2x64xf32>
    %2 = tpu.matmul %0, %1, %cst {dimension_numbers = #tpu.dot_dimension_numbers<[1], [0], [0], [1], [0, 0, 1, 1], [], []>} : vector<2x768xf32>, vector<768x64xf32>, vector<2x64xf32> -> vector<2x64xf32>
    %c0_3 = arith.constant 0 : index
    %c0_4 = arith.constant 0 : index
    %3 = vector.load %arg4[%c0_3, %c0_4] : memref<1x64xf32, #tpu.memory_space<vmem>>, vector<1x64xf32>
    %4 = vector.broadcast %3 : vector<1x64xf32> to vector<2x64xf32>
    %5 = arith.addf %2, %4 : vector<2x64xf32>
    %cst_5 = arith.constant 0.000000e+00 : f32
    %6 = vector.broadcast %cst_5 : f32 to vector<2x64xf32>
    %7 = arith.maximumf %5, %6 : vector<2x64xf32>
    %c0_6 = arith.constant 0 : index
    %c0_7 = arith.constant 0 : index
    %8 = vector.load %arg5[%c0_6, %c0_7] : memref<64x8xf32, #tpu.memory_space<vmem>>, vector<64x8xf32>
    %cst_8 = arith.constant dense<0.000000e+00> : vector<2x8xf32>
    %9 = tpu.matmul %7, %8, %cst_8 {dimension_numbers = #tpu.dot_dimension_numbers<[1], [0], [0], [1], [0, 0, 1, 1], [], []>} : vector<2x64xf32>, vector<64x8xf32>, vector<2x8xf32> -> vector<2x8xf32>
    %c0_9 = arith.constant 0 : index
    %c0_10 = arith.constant 0 : index
    %10 = vector.load %arg6[%c0_9, %c0_10] : memref<1x8xf32, #tpu.memory_space<vmem>>, vector<1x8xf32>
    %11 = vector.broadcast %10 : vector<1x8xf32> to vector<2x8xf32>
    %12 = arith.addf %9, %11 : vector<2x8xf32>
    %c0_11 = arith.constant 0 : index
    %c0_12 = arith.constant 0 : index
    %13 = vector.load %arg0[%c0_11, %c0_12] : memref<2x4xf32, #tpu.memory_space<vmem>>, vector<2x4xf32>
    %c0_13 = arith.constant 0 : index
    %c0_14 = arith.constant 0 : index
    %14 = vector.load %arg7[%c0_13, %c0_14] : memref<4x16xf32, #tpu.memory_space<vmem>>, vector<4x16xf32>
    %cst_15 = arith.constant dense<0.000000e+00> : vector<2x16xf32>
    %15 = tpu.matmul %13, %14, %cst_15 {dimension_numbers = #tpu.dot_dimension_numbers<[1], [0], [0], [1], [0, 0, 1, 1], [], []>} : vector<2x4xf32>, vector<4x16xf32>, vector<2x16xf32> -> vector<2x16xf32>
    %c0_16 = arith.constant 0 : index
    %c0_17 = arith.constant 0 : index
    %16 = vector.load %arg8[%c0_16, %c0_17] : memref<8x16xf32, #tpu.memory_space<vmem>>, vector<8x16xf32>
    %cst_18 = arith.constant dense<0.000000e+00> : vector<2x16xf32>
    %17 = tpu.matmul %12, %16, %cst_18 {dimension_numbers = #tpu.dot_dimension_numbers<[1], [0], [0], [1], [0, 0, 1, 1], [], []>} : vector<2x8xf32>, vector<8x16xf32>, vector<2x16xf32> -> vector<2x16xf32>
    %18 = arith.addf %15, %17 : vector<2x16xf32>
    %c0_19 = arith.constant 0 : index
    %c0_20 = arith.constant 0 : index
    %19 = vector.load %arg9[%c0_19, %c0_20] : memref<1x16xf32, #tpu.memory_space<vmem>>, vector<1x16xf32>
    %20 = vector.broadcast %19 : vector<1x16xf32> to vector<2x16xf32>
    %21 = arith.addf %18, %20 : vector<2x16xf32>
    %cst_21 = arith.constant 0.000000e+00 : f32
    %22 = vector.broadcast %cst_21 : f32 to vector<2x16xf32>
    %23 = arith.maximumf %21, %22 : vector<2x16xf32>
    %c0_22 = arith.constant 0 : index
    %c0_23 = arith.constant 0 : index
    %24 = vector.load %arg10[%c0_22, %c0_23] : memref<16x32xf32, #tpu.memory_space<vmem>>, vector<16x32xf32>
    %cst_24 = arith.constant dense<0.000000e+00> : vector<2x32xf32>
    %25 = tpu.matmul %23, %24, %cst_24 {dimension_numbers = #tpu.dot_dimension_numbers<[1], [0], [0], [1], [0, 0, 1, 1], [], []>} : vector<2x16xf32>, vector<16x32xf32>, vector<2x32xf32> -> vector<2x32xf32>
    %c0_25 = arith.constant 0 : index
    %c0_26 = arith.constant 0 : index
    %26 = vector.load %arg11[%c0_25, %c0_26] : memref<1x32xf32, #tpu.memory_space<vmem>>, vector<1x32xf32>
    %27 = vector.broadcast %26 : vector<1x32xf32> to vector<2x32xf32>
    %28 = arith.addf %25, %27 : vector<2x32xf32>
    %cst_27 = arith.constant 0.000000e+00 : f32
    %29 = vector.broadcast %cst_27 : f32 to vector<2x32xf32>
    %30 = arith.maximumf %28, %29 : vector<2x32xf32>
    %c0_28 = arith.constant 0 : index
    %c0_29 = arith.constant 0 : index
    %31 = vector.load %arg12[%c0_28, %c0_29] : memref<32x192xf32, #tpu.memory_space<vmem>>, vector<32x192xf32>
    %cst_30 = arith.constant dense<0.000000e+00> : vector<2x192xf32>
    %32 = tpu.matmul %30, %31, %cst_30 {dimension_numbers = #tpu.dot_dimension_numbers<[1], [0], [0], [1], [0, 0, 1, 1], [], []>} : vector<2x32xf32>, vector<32x192xf32>, vector<2x192xf32> -> vector<2x192xf32>
    %c0_31 = arith.constant 0 : index
    %c0_32 = arith.constant 0 : index
    %33 = vector.load %arg13[%c0_31, %c0_32] : memref<1x192xf32, #tpu.memory_space<vmem>>, vector<1x192xf32>
    %34 = vector.broadcast %33 : vector<1x192xf32> to vector<2x192xf32>
    %35 = arith.addf %32, %34 : vector<2x192xf32>
    %c0_33 = arith.constant 0 : index
    %c0_34 = arith.constant 0 : index
    %36 = vector.load %arg14[%c0_33, %c0_34] : memref<32x192xf32, #tpu.memory_space<vmem>>, vector<32x192xf32>
    %cst_35 = arith.constant dense<0.000000e+00> : vector<2x192xf32>
    %37 = tpu.matmul %30, %36, %cst_35 {dimension_numbers = #tpu.dot_dimension_numbers<[1], [0], [0], [1], [0, 0, 1, 1], [], []>} : vector<2x32xf32>, vector<32x192xf32>, vector<2x192xf32> -> vector<2x192xf32>
    %c0_36 = arith.constant 0 : index
    %c0_37 = arith.constant 0 : index
    %38 = vector.load %arg15[%c0_36, %c0_37] : memref<1x192xf32, #tpu.memory_space<vmem>>, vector<1x192xf32>
    %39 = vector.broadcast %38 : vector<1x192xf32> to vector<2x192xf32>
    %40 = arith.addf %37, %39 : vector<2x192xf32>
    %cst_38 = arith.constant 0.000000e+00 : f32
    %41 = vector.broadcast %cst_38 : f32 to vector<2x192xf32>
    %42 = arith.cmpf ogt, %40, %41 : vector<2x192xf32>
    %c0_39 = arith.constant 0 : index
    %c0_40 = arith.constant 0 : index
    %43 = vector.load %arg2[%c0_39, %c0_40] : memref<2x192xf32, #tpu.memory_space<vmem>>, vector<2x192xf32>
    %44 = arith.select %42, %35, %43 : vector<2x192xi1>, vector<2x192xf32>
    %c0_41 = arith.constant 0 : index
    %c0_42 = arith.constant 0 : index
    %45 = vector.load %arg17[%c0_41, %c0_42] : memref<192x256xf32, #tpu.memory_space<vmem>>, vector<192x256xf32>
    %cst_43 = arith.constant dense<0.000000e+00> : vector<2x256xf32>
    %46 = tpu.matmul %40, %45, %cst_43 {dimension_numbers = #tpu.dot_dimension_numbers<[1], [0], [0], [1], [0, 0, 1, 1], [], []>} : vector<2x192xf32>, vector<192x256xf32>, vector<2x256xf32> -> vector<2x256xf32>
    %c0_44 = arith.constant 0 : index
    %c0_45 = arith.constant 0 : index
    %47 = vector.load %arg19[%c0_44, %c0_45] : memref<2x256xf32, #tpu.memory_space<vmem>>, vector<2x256xf32>
    tpu.vector_store %arg19[%c0_44, %c0_45], %46 {strides = array<i32>} : memref<2x256xf32, #tpu.memory_space<vmem>>, vector<2x256xf32>,
    %c0_46 = arith.constant 0 : index
    %c0_47 = arith.constant 0 : index
    %48 = vector.load %arg16[%c0_46, %c0_47] : memref<192x768xf32, #tpu.memory_space<vmem>>, vector<192x768xf32>
    %cst_48 = arith.constant dense<0.000000e+00> : vector<2x768xf32>
    %49 = tpu.matmul %44, %48, %cst_48 {dimension_numbers = #tpu.dot_dimension_numbers<[1], [0], [0], [1], [0, 0, 1, 1], [], []>} : vector<2x192xf32>, vector<192x768xf32>, vector<2x768xf32> -> vector<2x768xf32>
    %c0_49 = arith.constant 0 : index
    %c0_50 = arith.constant 0 : index
    %50 = vector.load %arg18[%c0_49, %c0_50] : memref<2x768xf32, #tpu.memory_space<vmem>>, vector<2x768xf32>
    tpu.vector_store %arg18[%c0_49, %c0_50], %49 {strides = array<i32>} : memref<2x768xf32, #tpu.memory_space<vmem>>, vector<2x768xf32>,
    return
  }
}

</mosaic_0001>

<llo_original>
// kernel: _lambda_.1
$region0: #{_lambda_.1}
  #allocation0 [shape = 'u32[]', space=smem, size = 0x4, offset = 0x4, fixed_abs, tag = 'smem constant byte address 0x4 - core index']
  #allocation1 [shape = 'u32[144,128]{1,0:T(1,128)}', space=vmem, size = 0x12000, scoped, tag = 'internal scratch']
  %s0 = inlined_call_operand.vmem [shape: f32[2,4], index: 0, kind: input, shape index: {}]
  %s1 = inlined_call_operand.vmem [shape: f32[2,768], index: 1, kind: input, shape index: {}]
  %s2 = inlined_call_operand.vmem [shape: f32[2,192], index: 2, kind: input, shape index: {}]
  %s3 = inlined_call_operand.hbm [shape: f32[768,64], index: 3, kind: input, shape index: {}]
  %s4 = inlined_call_operand.vmem [shape: f32[1,64], index: 4, kind: input, shape index: {}]
  %s5 = inlined_call_operand.vmem [shape: f32[64,8], index: 5, kind: input, shape index: {}]
  %s6 = inlined_call_operand.vmem [shape: f32[1,8], index: 6, kind: input, shape index: {}]
  %s7 = inlined_call_operand.vmem [shape: f32[4,16], index: 7, kind: input, shape index: {}]
  %s8 = inlined_call_operand.vmem [shape: f32[8,16], index: 8, kind: input, shape index: {}]
  %s9 = inlined_call_operand.vmem [shape: f32[1,16], index: 9, kind: input, shape index: {}]
  %s10 = inlined_call_operand.vmem [shape: f32[16,32], index: 10, kind: input, shape index: {}]
  %s11 = inlined_call_operand.vmem [shape: f32[1,32], index: 11, kind: input, shape index: {}]
  %s12 = inlined_call_operand.vmem [shape: f32[32,192], index: 12, kind: input, shape index: {}]
  %s13 = inlined_call_operand.vmem [shape: f32[1,192], index: 13, kind: input, shape index: {}]
  %s14 = inlined_call_operand.hbm [shape: f32[32,192], index: 14, kind: input, shape index: {}]
  %s15 = inlined_call_operand.vmem [shape: f32[1,192], index: 15, kind: input, shape index: {}]
  %s16 = inlined_call_operand.hbm [shape: f32[192,768], index: 16, kind: input, shape index: {}]
  %s17 = inlined_call_operand.hbm [shape: f32[192,256], index: 17, kind: input, shape index: {}]
  %s18 = inlined_call_operand.vmem [shape: f32[2,768], index: 18, kind: output, shape index: {0}]
  %s19 = inlined_call_operand.vmem [shape: f32[2,256], index: 19, kind: output, shape index: {1}]
  %20 = xla_tuple %s18, %s19
  %s21 = sld [smem:[#allocation0]]
  $region106: #{_lambda_.1} parent=0
    _
  %s23 = ssub.s32 1, %s21
  %s24 = scalar_select 0, %s23, %s21
  $region1: #{_lambda_.1} parent=0
    #allocation2 [shape = 'u8[393216]{0}', space=vmem, size = 0x60000, scoped, tag = 'input window, operand 3, single buffered']
    #allocation3 [shape = 's32[1]{0}', space=sflag, size = 0x4, scoped, tag = 'scoped memory for _lambda_.1']
    #allocation4 [shape = 'u8[32768]{0}', space=vmem, size = 0x8000, scoped, tag = 'input window, operand 14, single buffered']
    #allocation5 [shape = 's32[1]{0}', space=sflag, size = 0x4, scoped, tag = 'scoped memory for _lambda_.1']
    #allocation6 [shape = 'u8[589824]{0}', space=vmem, size = 0x90000, scoped, tag = 'input window, operand 16, single buffered']
    #allocation7 [shape = 'u8[196608]{0}', space=vmem, size = 0x30000, scoped, tag = 'input window, operand 17, single buffered']
    #allocation8 [shape = 's32[1]{0}', space=sflag, size = 0x4, scoped, tag = 'scoped memory for _lambda_.1']
    %25 = vsyncpa [#allocation3], 0
    %26 = vsyncpa [#allocation5], 0
    %27 = vsyncpa [#allocation8], 0
    // Predicated region
    $region2: #{_lambda_.1} parent=1 // pred_check
      _
    $region3: #{_lambda_.1} parent=1 // pred_check_branch
      %29 = sbr.rel (0) target = $region5
    $region4: #{_lambda_.1} parent=1 // pred_region
      _
    $region5: #{_lambda_.1} parent=1 // pred_fallthru
      _
    // Predicated region
    $region6: #{_lambda_.1} parent=1 // pred_check
      _
    $region7: #{_lambda_.1} parent=1 // pred_check_branch
      %31 = sbr.rel (0) target = $region9
    $region8: #{_lambda_.1} parent=1 // pred_region
      _
    $region9: #{_lambda_.1} parent=1 // pred_fallthru
      _
    // Predicated region
    $region10: #{_lambda_.1} parent=1 // pred_check
      _
    $region11: #{_lambda_.1} parent=1 // pred_check_branch
      %33 = sbr.rel (0) target = $region13
    $region12: #{_lambda_.1} parent=1 // pred_region
      _
    $region13: #{_lambda_.1} parent=1 // pred_fallthru
      _
    // Predicated region
    $region14: #{_lambda_.1} parent=1 // pred_check
      _
    $region15: #{_lambda_.1} parent=1 // pred_check_branch
      %35 = sbr.rel (0) target = $region17
    $region16: #{_lambda_.1} parent=1 // pred_region
      %s37 = ssub.s32 12288, 12288
      %38 = vsyncadd [#allocation3], %s37
      %s39 = sshll.u32 [#allocation2], 4
      %s40 = int_to_ptr.vmem [resolvable:$true] %s39
      %45 = dma.hbm_to_vmem [thread:$0]  %s3, 12288, %s40, [#allocation3], 128, 128, 8
    $region17: #{_lambda_.1} parent=1 // pred_fallthru
      _
    // Predicated region
    $region18: #{_lambda_.1} parent=1 // pred_check
      _
    $region19: #{_lambda_.1} parent=1 // pred_check_branch
      %47 = sbr.rel (0) target = $region21
    $region20: #{_lambda_.1} parent=1 // pred_region
      _
    $region21: #{_lambda_.1} parent=1 // pred_fallthru
      _
    // Predicated region
    $region22: #{_lambda_.1} parent=1 // pred_check
      _
    $region23: #{_lambda_.1} parent=1 // pred_check_branch
      %49 = sbr.rel (0) target = $region25
    $region24: #{_lambda_.1} parent=1 // pred_region
      _
    $region25: #{_lambda_.1} parent=1 // pred_fallthru
      _
    // Predicated region
    $region26: #{_lambda_.1} parent=1 // pred_check
      _
    $region27: #{_lambda_.1} parent=1 // pred_check_branch
      %51 = sbr.rel (0) target = $region29
    $region28: #{_lambda_.1} parent=1 // pred_region
      _
    $region29: #{_lambda_.1} parent=1 // pred_fallthru
      _
    // Predicated region
    $region30: #{_lambda_.1} parent=1 // pred_check
      _
    $region31: #{_lambda_.1} parent=1 // pred_check_branch
      %53 = sbr.rel (0) target = $region33
    $region32: #{_lambda_.1} parent=1 // pred_region
      _
    $region33: #{_lambda_.1} parent=1 // pred_fallthru
      _
    // Predicated region
    $region34: #{_lambda_.1} parent=1 // pred_check
      _
    $region35: #{_lambda_.1} parent=1 // pred_check_branch
      %55 = sbr.rel (0) target = $region37
    $region36: #{_lambda_.1} parent=1 // pred_region
      _
    $region37: #{_lambda_.1} parent=1 // pred_fallthru
      _
    // Predicated region
    $region38: #{_lambda_.1} parent=1 // pred_check
      _
    $region39: #{_lambda_.1} parent=1 // pred_check_branch
      %57 = sbr.rel (0) target = $region41
    $region40: #{_lambda_.1} parent=1 // pred_region
      _
    $region41: #{_lambda_.1} parent=1 // pred_fallthru
      _
    // Predicated region
    $region42: #{_lambda_.1} parent=1 // pred_check
      _
    $region43: #{_lambda_.1} parent=1 // pred_check_branch
      %59 = sbr.rel (0) target = $region45
    $region44: #{_lambda_.1} parent=1 // pred_region
      _
    $region45: #{_lambda_.1} parent=1 // pred_fallthru
      _
    // Predicated region
    $region46: #{_lambda_.1} parent=1 // pred_check
      _
    $region47: #{_lambda_.1} parent=1 // pred_check_branch
      %61 = sbr.rel (0) target = $region49
    $region48: #{_lambda_.1} parent=1 // pred_region
      _
    $region49: #{_lambda_.1} parent=1 // pred_fallthru
      _
    // Predicated region
    $region50: #{_lambda_.1} parent=1 // pred_check
      _
    $region51: #{_lambda_.1} parent=1 // pred_check_branch
      %63 = sbr.rel (0) target = $region53
    $region52: #{_lambda_.1} parent=1 // pred_region
      _
    $region53: #{_lambda_.1} parent=1 // pred_fallthru
      _
    // Predicated region
    $region54: #{_lambda_.1} parent=1 // pred_check
      _
    $region55: #{_lambda_.1} parent=1 // pred_check_branch
      %65 = sbr.rel (0) target = $region57
    $region56: #{_lambda_.1} parent=1 // pred_region
      _
    $region57: #{_lambda_.1} parent=1 // pred_fallthru
      _
    // Predicated region
    $region58: #{_lambda_.1} parent=1 // pred_check
      _
    $region59: #{_lambda_.1} parent=1 // pred_check_branch
      %67 = sbr.rel (0) target = $region61
    $region60: #{_lambda_.1} parent=1 // pred_region
      %s69 = ssub.s32 1024, 1024
      %70 = vsyncadd [#allocation5], %s69
      %s71 = sshll.u32 [#allocation4], 4
      %s72 = int_to_ptr.vmem [resolvable:$true] %s71
      %77 = dma.hbm_to_vmem [thread:$0]  %s14, 1024, %s72, [#allocation5], 256, 256, 16
    $region61: #{_lambda_.1} parent=1 // pred_fallthru
      _
    // Predicated region
    $region62: #{_lambda_.1} parent=1 // pred_check
      _
    $region63: #{_lambda_.1} parent=1 // pred_check_branch
      %79 = sbr.rel (0) target = $region65
    $region64: #{_lambda_.1} parent=1 // pred_region
      _
    $region65: #{_lambda_.1} parent=1 // pred_fallthru
      _
    // Predicated region
    $region66: #{_lambda_.1} parent=1 // pred_check
      _
    $region67: #{_lambda_.1} parent=1 // pred_check_branch
      %81 = sbr.rel (0) target = $region69
    $region68: #{_lambda_.1} parent=1 // pred_region
      %s83 = ssub.s32 18432, 18432
      %84 = vsyncadd [#allocation5], %s83
      %s85 = sshll.u32 [#allocation6], 4
      %s86 = int_to_ptr.vmem [resolvable:$true] %s85
      %91 = dma.hbm_to_vmem [thread:$0]  %s16, 18432, %s86, [#allocation5], 768, 768, 48
    $region69: #{_lambda_.1} parent=1 // pred_fallthru
      _
    // Predicated region
    $region70: #{_lambda_.1} parent=1 // pred_check
      _
    $region71: #{_lambda_.1} parent=1 // pred_check_branch
      %93 = sbr.rel (0) target = $region73
    $region72: #{_lambda_.1} parent=1 // pred_region
      %s95 = ssub.s32 6144, 6144
      %96 = vsyncadd [#allocation8], %s95
      %s97 = sshll.u32 [#allocation7], 4
      %s98 = int_to_ptr.vmem [resolvable:$true] %s97
      %103 = dma.hbm_to_vmem [thread:$0]  %s17, 6144, %s98, [#allocation8], 256, 256, 16
    $region73: #{_lambda_.1} parent=1 // pred_fallthru
      _
    // Predicated region
    $region74: #{_lambda_.1} parent=1 // pred_check
      _
    $region75: #{_lambda_.1} parent=1 // pred_check_branch
      %105 = sbr.rel (0) target = $region77
    $region76: #{_lambda_.1} parent=1 // pred_region
      %106 = dma.done [#allocation3], 12288
    $region77: #{_lambda_.1} parent=1 // pred_fallthru
      _
    // Predicated region
    $region78: #{_lambda_.1} parent=1 // pred_check
      _
    $region79: #{_lambda_.1} parent=1 // pred_check_branch
      %108 = sbr.rel (0) target = $region81
    $region80: #{_lambda_.1} parent=1 // pred_region
      %109 = dma.done [#allocation5], 1024
    $region81: #{_lambda_.1} parent=1 // pred_fallthru
      _
    // Predicated region
    $region82: #{_lambda_.1} parent=1 // pred_check
      _
    $region83: #{_lambda_.1} parent=1 // pred_check_branch
      %111 = sbr.rel (0) target = $region85
    $region84: #{_lambda_.1} parent=1 // pred_region
      %112 = dma.done [#allocation5], 18432
    $region85: #{_lambda_.1} parent=1 // pred_fallthru
      _
    // Predicated region
    $region86: #{_lambda_.1} parent=1 // pred_check
      _
    $region87: #{_lambda_.1} parent=1 // pred_check_branch
      %114 = sbr.rel (0) target = $region89
    $region88: #{_lambda_.1} parent=1 // pred_region
      %115 = dma.done [#allocation8], 6144
    $region89: #{_lambda_.1} parent=1 // pred_fallthru
      _
    %v116 = vld [vmem:[%s1] sm:$0xff]
    %v117 = vld [vmem:[%s1 + $0x8] sm:$0xf]
    %v118 = vld [vmem:[#allocation2] sm:$0xff]
    %v119 = vld [vmem:[#allocation2 + $0x8] sm:$0xff]
    %v120 = vld [vmem:[#allocation2 + $0x10] sm:$0xff]
    %v121 = vld [vmem:[#allocation2 + $0x18] sm:$0xff]
    %v122 = vld [vmem:[#allocation2 + $0x20] sm:$0xff]
    %v123 = vld [vmem:[#allocation2 + $0x28] sm:$0xff]
    %v124 = vld [vmem:[#allocation2 + $0x30] sm:$0xff]
    %v125 = vld [vmem:[#allocation2 + $0x38] sm:$0xff]
    %v126 = vld [vmem:[#allocation2 + $0x40] sm:$0xff]
    %v127 = vld [vmem:[#allocation2 + $0x48] sm:$0xff]
    %v128 = vld [vmem:[#allocation2 + $0x50] sm:$0xff]
    %v129 = vld [vmem:[#allocation2 + $0x58] sm:$0xff]
    %v130 = vld [vmem:[#allocation2 + $0x60] sm:$0xff]
    %v131 = vld [vmem:[#allocation2 + $0x68] sm:$0xff]
    %v132 = vld [vmem:[#allocation2 + $0x70] sm:$0xff]
    %v133 = vld [vmem:[#allocation2 + $0x78] sm:$0xff]
    %v134 = vld [vmem:[#allocation2 + $0x80] sm:$0xff]
    %v135 = vld [vmem:[#allocation2 + $0x88] sm:$0xff]
    %v136 = vld [vmem:[#allocation2 + $0x90] sm:$0xff]
    %v137 = vld [vmem:[#allocation2 + $0x98] sm:$0xff]
    %v138 = vld [vmem:[#allocation2 + $0xa0] sm:$0xff]
    %v139 = vld [vmem:[#allocation2 + $0xa8] sm:$0xff]
    %v140 = vld [vmem:[#allocation2 + $0xb0] sm:$0xff]
    %v141 = vld [vmem:[#allocation2 + $0xb8] sm:$0xff]
    %v142 = vld [vmem:[#allocation2 + $0xc0] sm:$0xff]
    %v143 = vld [vmem:[#allocation2 + $0xc8] sm:$0xff]
    %v144 = vld [vmem:[#allocation2 + $0xd0] sm:$0xff]
    %v145 = vld [vmem:[#allocation2 + $0xd8] sm:$0xff]
    %v146 = vld [vmem:[#allocation2 + $0xe0] sm:$0xff]
    %v147 = vld [vmem:[#allocation2 + $0xe8] sm:$0xff]
    %v148 = vld [vmem:[#allocation2 + $0xf0] sm:$0xff]
    %v149 = vld [vmem:[#allocation2 + $0xf8] sm:$0xff]
    %v150 = vld [vmem:[#allocation2 + $0x100] sm:$0xff]
    %v151 = vld [vmem:[#allocation2 + $0x108] sm:$0xff]
    %v152 = vld [vmem:[#allocation2 + $0x110] sm:$0xff]
    %v153 = vld [vmem:[#allocation2 + $0x118] sm:$0xff]
    %v154 = vld [vmem:[#allocation2 + $0x120] sm:$0xff]
    %v155 = vld [vmem:[#allocation2 + $0x128] sm:$0xff]
    %v156 = vld [vmem:[#allocation2 + $0x130] sm:$0xff]
    %v157 = vld [vmem:[#allocation2 + $0x138] sm:$0xff]
    %v158 = vld [vmem:[#allocation2 + $0x140] sm:$0xff]
    %v159 = vld [vmem:[#allocation2 + $0x148] sm:$0xff]
    %v160 = vld [vmem:[#allocation2 + $0x150] sm:$0xff]
    %v161 = vld [vmem:[#allocation2 + $0x158] sm:$0xff]
    %v162 = vld [vmem:[#allocation2 + $0x160] sm:$0xff]
    %v163 = vld [vmem:[#allocation2 + $0x168] sm:$0xff]
    %v164 = vld [vmem:[#allocation2 + $0x170] sm:$0xff]
    %v165 = vld [vmem:[#allocation2 + $0x178] sm:$0xff]
    %v166 = vld [vmem:[#allocation2 + $0x180] sm:$0xff]
    %v167 = vld [vmem:[#allocation2 + $0x188] sm:$0xff]
    %v168 = vld [vmem:[#allocation2 + $0x190] sm:$0xff]
    %v169 = vld [vmem:[#allocation2 + $0x198] sm:$0xff]
    %v170 = vld [vmem:[#allocation2 + $0x1a0] sm:$0xff]
    %v171 = vld [vmem:[#allocation2 + $0x1a8] sm:$0xff]
    %v172 = vld [vmem:[#allocation2 + $0x1b0] sm:$0xff]
    %v173 = vld [vmem:[#allocation2 + $0x1b8] sm:$0xff]
    %v174 = vld [vmem:[#allocation2 + $0x1c0] sm:$0xff]
    %v175 = vld [vmem:[#allocation2 + $0x1c8] sm:$0xff]
    %v176 = vld [vmem:[#allocation2 + $0x1d0] sm:$0xff]
    %v177 = vld [vmem:[#allocation2 + $0x1d8] sm:$0xff]
    %v178 = vld [vmem:[#allocation2 + $0x1e0] sm:$0xff]
    %v179 = vld [vmem:[#allocation2 + $0x1e8] sm:$0xff]
    %v180 = vld [vmem:[#allocation2 + $0x1f0] sm:$0xff]
    %v181 = vld [vmem:[#allocation2 + $0x1f8] sm:$0xff]
    %v182 = vld [vmem:[#allocation2 + $0x200] sm:$0xff]
    %v183 = vld [vmem:[#allocation2 + $0x208] sm:$0xff]
    %v184 = vld [vmem:[#allocation2 + $0x210] sm:$0xff]
    %v185 = vld [vmem:[#allocation2 + $0x218] sm:$0xff]
    %v186 = vld [vmem:[#allocation2 + $0x220] sm:$0xff]
    %v187 = vld [vmem:[#allocation2 + $0x228] sm:$0xff]
    %v188 = vld [vmem:[#allocation2 + $0x230] sm:$0xff]
    %v189 = vld [vmem:[#allocation2 + $0x238] sm:$0xff]
    %v190 = vld [vmem:[#allocation2 + $0x240] sm:$0xff]
    %v191 = vld [vmem:[#allocation2 + $0x248] sm:$0xff]
    %v192 = vld [vmem:[#allocation2 + $0x250] sm:$0xff]
    %v193 = vld [vmem:[#allocation2 + $0x258] sm:$0xff]
    %v194 = vld [vmem:[#allocation2 + $0x260] sm:$0xff]
    %v195 = vld [vmem:[#allocation2 + $0x268] sm:$0xff]
    %v196 = vld [vmem:[#allocation2 + $0x270] sm:$0xff]
    %v197 = vld [vmem:[#allocation2 + $0x278] sm:$0xff]
    %v198 = vld [vmem:[#allocation2 + $0x280] sm:$0xff]
    %v199 = vld [vmem:[#allocation2 + $0x288] sm:$0xff]
    %v200 = vld [vmem:[#allocation2 + $0x290] sm:$0xff]
    %v201 = vld [vmem:[#allocation2 + $0x298] sm:$0xff]
    %v202 = vld [vmem:[#allocation2 + $0x2a0] sm:$0xff]
    %v203 = vld [vmem:[#allocation2 + $0x2a8] sm:$0xff]
    %v204 = vld [vmem:[#allocation2 + $0x2b0] sm:$0xff]
    %v205 = vld [vmem:[#allocation2 + $0x2b8] sm:$0xff]
    %v206 = vld [vmem:[#allocation2 + $0x2c0] sm:$0xff]
    %v207 = vld [vmem:[#allocation2 + $0x2c8] sm:$0xff]
    %v208 = vld [vmem:[#allocation2 + $0x2d0] sm:$0xff]
    %v209 = vld [vmem:[#allocation2 + $0x2d8] sm:$0xff]
    %v210 = vld [vmem:[#allocation2 + $0x2e0] sm:$0xff]
    %v211 = vld [vmem:[#allocation2 + $0x2e8] sm:$0xff]
    %v212 = vld [vmem:[#allocation2 + $0x2f0] sm:$0xff]
    %v213 = vld [vmem:[#allocation2 + $0x2f8] sm:$0xff]
    %v214 = vld [vmem:[%s4] sm:$0x1]
    %v216 = vlaneseq
    %v217 = vshrl.u32 %v216, 7
    %v218 = vsub.s32 0, %v217
    %v219 = vrot.slane %v214, %v218
    %v223 = vcombine.high %v116, %v116
    %v225 = vunpack.c.l.s4 1983009808
    %v226 = vunpack.c.0.s8 %v225
    %v227 = vlaneseq
    %v228 = vshrl.u32 %v227, 7
    %v229 = vsub.s32 %v226, %v228
    %v230 = vrot.slane %v116, %v229
    %v232 = vunpack.c.l.s4 1983009808
    %v233 = vunpack.c.0.s8 %v232
    %v234 = vlaneseq
    %v235 = vshrl.u32 %v234, 7
    %v236 = vsub.s32 %v233, %v235
    %v237 = vrot.slane %v223, %v236
    %v238 = vcombine.high %v230, %v230
    %v239 = vcombine.high %v237, %v237
    %v241 = vunpack.c.l.s4 1983009808
    %v242 = vunpack.c.0.s8 %v241
    %v243 = vlaneseq
    %v244 = vshrl.u32 %v243, 7
    %v245 = vsub.s32 %v242, %v244
    %v246 = vrot.slane %v117, %v245
    %v247 = vcombine.high %v246, %v246
    %254 = vmatprep.subr.mxu0 0.0
    %255 = vmatpush1.msra.mxu0 %v118
    %256 = vmatprep.subr.mxu0 0.0
    %257 = vmatpush1.msra.mxu0 %v119
    %258 = vmatprep.subr.mxu0 0.0
    %259 = vmatpush1.msra.mxu0 %v120
    %260 = vmatprep.subr.mxu0 0.0
    %261 = vmatpush1.msra.mxu0 %v121
    %262 = vmatprep.subr.mxu0 0.0
    %263 = vmatpush1.msra.mxu0 %v122
    %264 = vmatprep.subr.mxu0 0.0
    %265 = vmatpush1.msra.mxu0 %v123
    %266 = vmatprep.subr.mxu0 0.0
    %267 = vmatpush1.msra.mxu0 %v124
    %268 = vmatprep.subr.mxu0 0.0
    %269 = vmatpush1.msra.mxu0 %v125
    %270 = vmatprep.subr.mxu0 0.0
    %271 = vmatpush1.msra.mxu0 %v126
    %272 = vmatprep.subr.mxu0 0.0
    %273 = vmatpush1.msra.mxu0 %v127
    %274 = vmatprep.subr.mxu0 0.0
    %275 = vmatpush1.msra.mxu0 %v128
    %276 = vmatprep.subr.mxu0 0.0
    %277 = vmatpush1.msra.mxu0 %v129
    %278 = vmatprep.subr.mxu0 0.0
    %279 = vmatpush1.msra.mxu0 %v130
    %280 = vmatprep.subr.mxu0 0.0
    %281 = vmatpush1.msra.mxu0 %v131
    %282 = vmatprep.subr.mxu0 0.0
    %283 = vmatpush1.msra.mxu0 %v132
    %284 = vmatprep.subr.mxu0 0.0
    %285 = vmatpush1.msra.mxu0 %v133
    %286 = vmatprep.subr.mxu0 0.0
    %287 = vmatpush1.msra.mxu0 %v134
    %288 = vmatprep.subr.mxu0 0.0
    %289 = vmatpush1.msra.mxu0 %v135
    %290 = vmatprep.subr.mxu0 0.0
    %291 = vmatpush1.msra.mxu0 %v136
    %292 = vmatprep.subr.mxu0 0.0
    %293 = vmatpush1.msra.mxu0 %v137
    %294 = vmatprep.subr.mxu0 0.0
    %295 = vmatpush1.msra.mxu0 %v138
    %296 = vmatprep.subr.mxu0 0.0
    %297 = vmatpush1.msra.mxu0 %v139
    %298 = vmatprep.subr.mxu0 0.0
    %299 = vmatpush1.msra.mxu0 %v140
    %300 = vmatprep.subr.mxu0 0.0
    %301 = vmatpush1.msra.mxu0 %v141
    %302 = vmatprep.subr.mxu0 0.0
    %303 = vmatpush1.msra.mxu0 %v142
    %304 = vmatprep.subr.mxu0 0.0
    %305 = vmatpush1.msra.mxu0 %v143
    %306 = vmatprep.subr.mxu0 0.0
    %307 = vmatpush1.msra.mxu0 %v144
    %308 = vmatprep.subr.mxu0 0.0
    %309 = vmatpush1.msra.mxu0 %v145
    %310 = vmatprep.subr.mxu0 0.0
    %311 = vmatpush1.msra.mxu0 %v146
    %312 = vmatprep.subr.mxu0 0.0
    %313 = vmatpush1.msra.mxu0 %v147
    %314 = vmatprep.subr.mxu0 0.0
    %315 = vmatpush1.msra.mxu0 %v148
    %316 = vmatprep.subr.mxu0 0.0
    %317 = vmatpush1.msra.mxu0 %v149
    %318 = vmatprep.mubr.f32.mxu0 %v238
    %319 = vmatmul.mubr.f32.gmra.mrb[0].mxu0 %v230
    %v320 = vpop.f32.mrb[0].mxu0
    %v321 = vadd.f32 %v219, %v320
    %v322 = vpop.f32.mrb[0].mxu0
    %323 = vdwg.mxu0
    %324 = vmatprep.subr.mxu0 0.0
    %325 = vmatpush1.msra.mxu0 %v150
    %326 = vmatprep.subr.mxu0 0.0
    %327 = vmatpush1.msra.mxu0 %v151
    %328 = vmatprep.subr.mxu0 0.0
    %329 = vmatpush1.msra.mxu0 %v152
    %330 = vmatprep.subr.mxu0 0.0
    %331 = vmatpush1.msra.mxu0 %v153
    %332 = vmatprep.subr.mxu0 0.0
    %333 = vmatpush1.msra.mxu0 %v154
    %334 = vmatprep.subr.mxu0 0.0
    %335 = vmatpush1.msra.mxu0 %v155
    %336 = vmatprep.subr.mxu0 0.0
    %337 = vmatpush1.msra.mxu0 %v156
    %338 = vmatprep.subr.mxu0 0.0
    %339 = vmatpush1.msra.mxu0 %v157
    %340 = vmatprep.subr.mxu0 0.0
    %341 = vmatpush1.msra.mxu0 %v158
    %342 = vmatprep.subr.mxu0 0.0
    %343 = vmatpush1.msra.mxu0 %v159
    %344 = vmatprep.subr.mxu0 0.0
    %345 = vmatpush1.msra.mxu0 %v160
    %346 = vmatprep.subr.mxu0 0.0
    %347 = vmatpush1.msra.mxu0 %v161
    %348 = vmatprep.subr.mxu0 0.0
    %349 = vmatpush1.msra.mxu0 %v162
    %350 = vmatprep.subr.mxu0 0.0
    %351 = vmatpush1.msra.mxu0 %v163
    %352 = vmatprep.subr.mxu0 0.0
    %353 = vmatpush1.msra.mxu0 %v164
    %354 = vmatprep.subr.mxu0 0.0
    %355 = vmatpush1.msra.mxu0 %v165
    %356 = vmatprep.subr.mxu0 0.0
    %357 = vmatpush1.msra.mxu0 %v166
    %358 = vmatprep.subr.mxu0 0.0
    %359 = vmatpush1.msra.mxu0 %v167
    %360 = vmatprep.subr.mxu0 0.0
    %361 = vmatpush1.msra.mxu0 %v168
    %362 = vmatprep.subr.mxu0 0.0
    %363 = vmatpush1.msra.mxu0 %v169
    %364 = vmatprep.subr.mxu0 0.0
    %365 = vmatpush1.msra.mxu0 %v170
    %366 = vmatprep.subr.mxu0 0.0
    %367 = vmatpush1.msra.mxu0 %v171
    %368 = vmatprep.subr.mxu0 0.0
    %369 = vmatpush1.msra.mxu0 %v172
    %370 = vmatprep.subr.mxu0 0.0
    %371 = vmatpush1.msra.mxu0 %v173
    %372 = vmatprep.subr.mxu0 0.0
    %373 = vmatpush1.msra.mxu0 %v174
    %374 = vmatprep.subr.mxu0 0.0
    %375 = vmatpush1.msra.mxu0 %v175
    %376 = vmatprep.subr.mxu0 0.0
    %377 = vmatpush1.msra.mxu0 %v176
    %378 = vmatprep.subr.mxu0 0.0
    %379 = vmatpush1.msra.mxu0 %v177
    %380 = vmatprep.subr.mxu0 0.0
    %381 = vmatpush1.msra.mxu0 %v178
    %382 = vmatprep.subr.mxu0 0.0
    %383 = vmatpush1.msra.mxu0 %v179
    %384 = vmatprep.subr.mxu0 0.0
    %385 = vmatpush1.msra.mxu0 %v180
    %386 = vmatprep.subr.mxu0 0.0
    %387 = vmatpush1.msra.mxu0 %v181
    %388 = vmatprep.mubr.f32.mxu0 %v239
    %389 = vmatmul.mubr.f32.gmra.mrb[0].mxu0 %v237
    %v390 = vpop.f32.mrb[0].mxu0
    %v391 = vadd.f32 %v321, %v390
    %v392 = vpop.f32.mrb[0].mxu0
    %393 = vdwg.mxu0
    %394 = vmatprep.subr.mxu0 0.0
    %395 = vmatpush1.msra.mxu0 %v182
    %396 = vmatprep.subr.mxu0 0.0
    %397 = vmatpush1.msra.mxu0 %v183
    %398 = vmatprep.subr.mxu0 0.0
    %399 = vmatpush1.msra.mxu0 %v184
    %400 = vmatprep.subr.mxu0 0.0
    %401 = vmatpush1.msra.mxu0 %v185
    %402 = vmatprep.subr.mxu0 0.0
    %403 = vmatpush1.msra.mxu0 %v186
    %404 = vmatprep.subr.mxu0 0.0
    %405 = vmatpush1.msra.mxu0 %v187
    %406 = vmatprep.subr.mxu0 0.0
    %407 = vmatpush1.msra.mxu0 %v188
    %408 = vmatprep.subr.mxu0 0.0
    %409 = vmatpush1.msra.mxu0 %v189
    %410 = vmatprep.subr.mxu0 0.0
    %411 = vmatpush1.msra.mxu0 %v190
    %412 = vmatprep.subr.mxu0 0.0
    %413 = vmatpush1.msra.mxu0 %v191
    %414 = vmatprep.subr.mxu0 0.0
    %415 = vmatpush1.msra.mxu0 %v192
    %416 = vmatprep.subr.mxu0 0.0
    %417 = vmatpush1.msra.mxu0 %v193
    %418 = vmatprep.subr.mxu0 0.0
    %419 = vmatpush1.msra.mxu0 %v194
    %420 = vmatprep.subr.mxu0 0.0
    %421 = vmatpush1.msra.mxu0 %v195
    %422 = vmatprep.subr.mxu0 0.0
    %423 = vmatpush1.msra.mxu0 %v196
    %424 = vmatprep.subr.mxu0 0.0
    %425 = vmatpush1.msra.mxu0 %v197
    %426 = vmatprep.subr.mxu0 0.0
    %427 = vmatpush1.msra.mxu0 %v198
    %428 = vmatprep.subr.mxu0 0.0
    %429 = vmatpush1.msra.mxu0 %v199
    %430 = vmatprep.subr.mxu0 0.0
    %431 = vmatpush1.msra.mxu0 %v200
    %432 = vmatprep.subr.mxu0 0.0
    %433 = vmatpush1.msra.mxu0 %v201
    %434 = vmatprep.subr.mxu0 0.0
    %435 = vmatpush1.msra.mxu0 %v202
    %436 = vmatprep.subr.mxu0 0.0
    %437 = vmatpush1.msra.mxu0 %v203
    %438 = vmatprep.subr.mxu0 0.0
    %439 = vmatpush1.msra.mxu0 %v204
    %440 = vmatprep.subr.mxu0 0.0
    %441 = vmatpush1.msra.mxu0 %v205
    %442 = vmatprep.subr.mxu0 0.0
    %443 = vmatpush1.msra.mxu0 %v206
    %444 = vmatprep.subr.mxu0 0.0
    %445 = vmatpush1.msra.mxu0 %v207
    %446 = vmatprep.subr.mxu0 0.0
    %447 = vmatpush1.msra.mxu0 %v208
    %448 = vmatprep.subr.mxu0 0.0
    %449 = vmatpush1.msra.mxu0 %v209
    %450 = vmatprep.subr.mxu0 0.0
    %451 = vmatpush1.msra.mxu0 %v210
    %452 = vmatprep.subr.mxu0 0.0
    %453 = vmatpush1.msra.mxu0 %v211
    %454 = vmatprep.subr.mxu0 0.0
    %455 = vmatpush1.msra.mxu0 %v212
    %456 = vmatprep.subr.mxu0 0.0
    %457 = vmatpush1.msra.mxu0 %v213
    %458 = vmatprep.mubr.f32.mxu0 %v247
    %459 = vmatmul.mubr.f32.gmra.mrb[0].mxu0 %v246
    %v460 = vpop.f32.mrb[0].mxu0
    %v461 = vadd.f32 %v391, %v460
    %v462 = vpop.f32.mrb[0].mxu0
    %463 = vdwg.mxu0
    %v464 = vmax.f32 %v461, 0.0
    %v465 = vld [vmem:[%s5] sm:$0xff]
    %v466 = vld [vmem:[%s5 + $0x8] sm:$0xff]
    %v467 = vld [vmem:[%s5 + $0x10] sm:$0xff]
    %v468 = vld [vmem:[%s5 + $0x18] sm:$0xff]
    %v469 = vld [vmem:[%s5 + $0x20] sm:$0xff]
    %v470 = vld [vmem:[%s5 + $0x28] sm:$0xff]
    %v471 = vld [vmem:[%s5 + $0x30] sm:$0xff]
    %v472 = vld [vmem:[%s5 + $0x38] sm:$0xff]
    %v473 = vld [vmem:[%s6] sm:$0x1]
    %v475 = vlaneseq
    %v476 = vshrl.u32 %v475, 7
    %v477 = vsub.s32 0, %v476
    %v478 = vrot.slane %v473, %v477
    %vm480 = vcmask 523264
    %v482 = vsel %vm480, %v464, 0
    %484 = vmatprep.subr.mxu0 0.0
    %485 = vmatpush1.msra.mxu0 %v465
    %486 = vmatprep.subr.mxu0 0.0
    %487 = vmatpush1.msra.mxu0 %v466
    %488 = vmatprep.subr.mxu0 0.0
    %489 = vmatpush1.msra.mxu0 %v467
    %490 = vmatprep.subr.mxu0 0.0
    %491 = vmatpush1.msra.mxu0 %v468
    %492 = vmatprep.subr.mxu0 0.0
    %493 = vmatpush1.msra.mxu0 %v469
    %494 = vmatprep.subr.mxu0 0.0
    %495 = vmatpush1.msra.mxu0 %v470
    %496 = vmatprep.subr.mxu0 0.0
    %497 = vmatpush1.msra.mxu0 %v471
    %498 = vmatprep.subr.mxu0 0.0
    %499 = vmatpush1.msra.mxu0 %v472
    %500 = vmatprep.subr.mxu0 0.0
    %501 = vmatpush1.msra.mxu0 0.0
    %502 = vmatprep.subr.mxu0 0.0
    %503 = vmatpush1.msra.mxu0 0.0
    %504 = vmatprep.subr.mxu0 0.0
    %505 = vmatpush1.msra.mxu0 0.0
    %506 = vmatprep.subr.mxu0 0.0
    %507 = vmatpush1.msra.mxu0 0.0
    %508 = vmatprep.subr.mxu0 0.0
    %509 = vmatpush1.msra.mxu0 0.0
    %510 = vmatprep.subr.mxu0 0.0
    %511 = vmatpush1.msra.mxu0 0.0
    %512 = vmatprep.subr.mxu0 0.0
    %513 = vmatpush1.msra.mxu0 0.0
    %514 = vmatprep.subr.mxu0 0.0
    %515 = vmatpush1.msra.mxu0 0.0
    %516 = vmatprep.subr.mxu0 0.0
    %517 = vmatpush1.msra.mxu0 0.0
    %518 = vmatprep.subr.mxu0 0.0
    %519 = vmatpush1.msra.mxu0 0.0
    %520 = vmatprep.subr.mxu0 0.0
    %521 = vmatpush1.msra.mxu0 0.0
    %522 = vmatprep.subr.mxu0 0.0
    %523 = vmatpush1.msra.mxu0 0.0
    %524 = vmatprep.subr.mxu0 0.0
    %525 = vmatpush1.msra.mxu0 0.0
    %526 = vmatprep.subr.mxu0 0.0
    %527 = vmatpush1.msra.mxu0 0.0
    %528 = vmatprep.subr.mxu0 0.0
    %529 = vmatpush1.msra.mxu0 0.0
    %530 = vmatprep.subr.mxu0 0.0
    %531 = vmatpush1.msra.mxu0 0.0
    %532 = vmatprep.subr.mxu0 0.0
    %533 = vmatpush1.msra.mxu0 0.0
    %534 = vmatprep.subr.mxu0 0.0
    %535 = vmatpush1.msra.mxu0 0.0
    %536 = vmatprep.subr.mxu0 0.0
    %537 = vmatpush1.msra.mxu0 0.0
    %538 = vmatprep.subr.mxu0 0.0
    %539 = vmatpush1.msra.mxu0 0.0
    %540 = vmatprep.subr.mxu0 0.0
    %541 = vmatpush1.msra.mxu0 0.0
    %542 = vmatprep.subr.mxu0 0.0
    %543 = vmatpush1.msra.mxu0 0.0
    %544 = vmatprep.subr.mxu0 0.0
    %545 = vmatpush1.msra.mxu0 0.0
    %546 = vmatprep.subr.mxu0 0.0
    %547 = vmatpush1.msra.mxu0 0.0
    %548 = vmatprep.mubr.f32.mxu0 0.0
    %549 = vmatmul.mubr.f32.gmra.mrb[0].mxu0 %v482
    %v550 = vpop.f32.mrb[0].mxu0
    %v551 = vadd.f32 %v478, %v550
    %v552 = vpop.f32.mrb[0].mxu0
    %553 = vdwg.mxu0
    %v554 = vld [vmem:[%s0] sm:$0x3]
    %v555 = vld [vmem:[%s7] sm:$0xf]
    %v556 = vld [vmem:[%s8] sm:$0xff]
    %vm557 = vcmask 64512
    %v559 = vsel %vm557, %v551, 0
    %561 = vmatprep.subr.mxu0 0.0
    %562 = vmatpush1.msra.mxu0 %v556
    %563 = vmatprep.subr.mxu0 0.0
    %564 = vmatpush1.msra.mxu0 0.0
    %565 = vmatprep.subr.mxu0 0.0
    %566 = vmatpush1.msra.mxu0 0.0
    %567 = vmatprep.subr.mxu0 0.0
    %568 = vmatpush1.msra.mxu0 0.0
    %569 = vmatprep.subr.mxu0 0.0
    %570 = vmatpush1.msra.mxu0 0.0
    %571 = vmatprep.subr.mxu0 0.0
    %572 = vmatpush1.msra.mxu0 0.0
    %573 = vmatprep.subr.mxu0 0.0
    %574 = vmatpush1.msra.mxu0 0.0
    %575 = vmatprep.subr.mxu0 0.0
    %576 = vmatpush1.msra.mxu0 0.0
    %577 = vmatprep.subr.mxu0 0.0
    %578 = vmatpush1.msra.mxu0 0.0
    %579 = vmatprep.subr.mxu0 0.0
    %580 = vmatpush1.msra.mxu0 0.0
    %581 = vmatprep.subr.mxu0 0.0
    %582 = vmatpush1.msra.mxu0 0.0
    %583 = vmatprep.subr.mxu0 0.0
    %584 = vmatpush1.msra.mxu0 0.0
    %585 = vmatprep.subr.mxu0 0.0
    %586 = vmatpush1.msra.mxu0 0.0
    %587 = vmatprep.subr.mxu0 0.0
    %588 = vmatpush1.msra.mxu0 0.0
    %589 = vmatprep.subr.mxu0 0.0
    %590 = vmatpush1.msra.mxu0 0.0
    %591 = vmatprep.subr.mxu0 0.0
    %592 = vmatpush1.msra.mxu0 0.0
    %593 = vmatprep.subr.mxu0 0.0
    %594 = vmatpush1.msra.mxu0 0.0
    %595 = vmatprep.subr.mxu0 0.0
    %596 = vmatpush1.msra.mxu0 0.0
    %597 = vmatprep.subr.mxu0 0.0
    %598 = vmatpush1.msra.mxu0 0.0
    %599 = vmatprep.subr.mxu0 0.0
    %600 = vmatpush1.msra.mxu0 0.0
    %601 = vmatprep.subr.mxu0 0.0
    %602 = vmatpush1.msra.mxu0 0.0
    %603 = vmatprep.subr.mxu0 0.0
    %604 = vmatpush1.msra.mxu0 0.0
    %605 = vmatprep.subr.mxu0 0.0
    %606 = vmatpush1.msra.mxu0 0.0
    %607 = vmatprep.subr.mxu0 0.0
    %608 = vmatpush1.msra.mxu0 0.0
    %609 = vmatprep.subr.mxu0 0.0
    %610 = vmatpush1.msra.mxu0 0.0
    %611 = vmatprep.subr.mxu0 0.0
    %612 = vmatpush1.msra.mxu0 0.0
    %613 = vmatprep.subr.mxu0 0.0
    %614 = vmatpush1.msra.mxu0 0.0
    %615 = vmatprep.subr.mxu0 0.0
    %616 = vmatpush1.msra.mxu0 0.0
    %617 = vmatprep.subr.mxu0 0.0
    %618 = vmatpush1.msra.mxu0 0.0
    %619 = vmatprep.subr.mxu0 0.0
    %620 = vmatpush1.msra.mxu0 0.0
    %621 = vmatprep.subr.mxu0 0.0
    %622 = vmatpush1.msra.mxu0 0.0
    %623 = vmatprep.subr.mxu0 0.0
    %624 = vmatpush1.msra.mxu0 0.0
    %625 = vmatprep.mubr.f32.mxu0 0.0
    %626 = vmatmul.mubr.f32.gmra.mrb[0].mxu0 %v559
    %v627 = vpop.f32.mrb[0].mxu0
    %v628 = vadd.f32 0.0, %v627
    %v629 = vpop.f32.mrb[0].mxu0
    %630 = vdwg.mxu0
    %vm631 = vcmask 31744
    %v633 = vsel %vm631, %v554, 0
    %vm635 = vcmask 1043456
    %v637 = vsel %vm635, %v555, 0
    %639 = vmatprep.subr.mxu0 0.0
    %640 = vmatpush1.msra.mxu0 %v637
    %641 = vmatprep.subr.mxu0 0.0
    %642 = vmatpush1.msra.mxu0 0.0
    %643 = vmatprep.subr.mxu0 0.0
    %644 = vmatpush1.msra.mxu0 0.0
    %645 = vmatprep.subr.mxu0 0.0
    %646 = vmatpush1.msra.mxu0 0.0
    %647 = vmatprep.subr.mxu0 0.0
    %648 = vmatpush1.msra.mxu0 0.0
    %649 = vmatprep.subr.mxu0 0.0
    %650 = vmatpush1.msra.mxu0 0.0
    %651 = vmatprep.subr.mxu0 0.0
    %652 = vmatpush1.msra.mxu0 0.0
    %653 = vmatprep.subr.mxu0 0.0
    %654 = vmatpush1.msra.mxu0 0.0
    %655 = vmatprep.subr.mxu0 0.0
    %656 = vmatpush1.msra.mxu0 0.0
    %657 = vmatprep.subr.mxu0 0.0
    %658 = vmatpush1.msra.mxu0 0.0
    %659 = vmatprep.subr.mxu0 0.0
    %660 = vmatpush1.msra.mxu0 0.0
    %661 = vmatprep.subr.mxu0 0.0
    %662 = vmatpush1.msra.mxu0 0.0
    %663 = vmatprep.subr.mxu0 0.0
    %664 = vmatpush1.msra.mxu0 0.0
    %665 = vmatprep.subr.mxu0 0.0
    %666 = vmatpush1.msra.mxu0 0.0
    %667 = vmatprep.subr.mxu0 0.0
    %668 = vmatpush1.msra.mxu0 0.0
    %669 = vmatprep.subr.mxu0 0.0
    %670 = vmatpush1.msra.mxu0 0.0
    %671 = vmatprep.subr.mxu0 0.0
    %672 = vmatpush1.msra.mxu0 0.0
    %673 = vmatprep.subr.mxu0 0.0
    %674 = vmatpush1.msra.mxu0 0.0
    %675 = vmatprep.subr.mxu0 0.0
    %676 = vmatpush1.msra.mxu0 0.0
    %677 = vmatprep.subr.mxu0 0.0
    %678 = vmatpush1.msra.mxu0 0.0
    %679 = vmatprep.subr.mxu0 0.0
    %680 = vmatpush1.msra.mxu0 0.0
    %681 = vmatprep.subr.mxu0 0.0
    %682 = vmatpush1.msra.mxu0 0.0
    %683 = vmatprep.subr.mxu0 0.0
    %684 = vmatpush1.msra.mxu0 0.0
    %685 = vmatprep.subr.mxu0 0.0
    %686 = vmatpush1.msra.mxu0 0.0
    %687 = vmatprep.subr.mxu0 0.0
    %688 = vmatpush1.msra.mxu0 0.0
    %689 = vmatprep.subr.mxu0 0.0
    %690 = vmatpush1.msra.mxu0 0.0
    %691 = vmatprep.subr.mxu0 0.0
    %692 = vmatpush1.msra.mxu0 0.0
    %693 = vmatprep.subr.mxu0 0.0
    %694 = vmatpush1.msra.mxu0 0.0
    %695 = vmatprep.subr.mxu0 0.0
    %696 = vmatpush1.msra.mxu0 0.0
    %697 = vmatprep.subr.mxu0 0.0
    %698 = vmatpush1.msra.mxu0 0.0
    %699 = vmatprep.subr.mxu0 0.0
    %700 = vmatpush1.msra.mxu0 0.0
    %701 = vmatprep.subr.mxu0 0.0
    %702 = vmatpush1.msra.mxu0 0.0
    %703 = vmatprep.mubr.f32.mxu0 0.0
    %704 = vmatmul.mubr.f32.gmra.mrb[0].mxu0 %v633
    %v705 = vpop.f32.mrb[0].mxu0
    %v706 = vadd.f32 %v628, %v705
    %v707 = vpop.f32.mrb[0].mxu0
    %708 = vdwg.mxu0
    %v709 = vld [vmem:[%s9] sm:$0x1]
    %v711 = vlaneseq
    %v712 = vshrl.u32 %v711, 7
    %v713 = vsub.s32 0, %v712
    %v714 = vrot.slane %v709, %v713
    %v716 = vadd.f32 %v706, %v714
    %v717 = vmax.f32 %v716, 0.0
    %v718 = vld [vmem:[%s10] sm:$0xff]
    %v719 = vld [vmem:[%s10 + $0x8] sm:$0xff]
    %v720 = vld [vmem:[%s11] sm:$0x1]
    %v722 = vlaneseq
    %v723 = vshrl.u32 %v722, 7
    %v724 = vsub.s32 0, %v723
    %v725 = vrot.slane %v720, %v724
    %vm727 = vcmask 130048
    %v729 = vsel %vm727, %v717, 0
    %731 = vmatprep.subr.mxu0 0.0
    %732 = vmatpush1.msra.mxu0 %v718
    %733 = vmatprep.subr.mxu0 0.0
    %734 = vmatpush1.msra.mxu0 %v719
    %735 = vmatprep.subr.mxu0 0.0
    %736 = vmatpush1.msra.mxu0 0.0
    %737 = vmatprep.subr.mxu0 0.0
    %738 = vmatpush1.msra.mxu0 0.0
    %739 = vmatprep.subr.mxu0 0.0
    %740 = vmatpush1.msra.mxu0 0.0
    %741 = vmatprep.subr.mxu0 0.0
    %742 = vmatpush1.msra.mxu0 0.0
    %743 = vmatprep.subr.mxu0 0.0
    %744 = vmatpush1.msra.mxu0 0.0
    %745 = vmatprep.subr.mxu0 0.0
    %746 = vmatpush1.msra.mxu0 0.0
    %747 = vmatprep.subr.mxu0 0.0
    %748 = vmatpush1.msra.mxu0 0.0
    %749 = vmatprep.subr.mxu0 0.0
    %750 = vmatpush1.msra.mxu0 0.0
    %751 = vmatprep.subr.mxu0 0.0
    %752 = vmatpush1.msra.mxu0 0.0
    %753 = vmatprep.subr.mxu0 0.0
    %754 = vmatpush1.msra.mxu0 0.0
    %755 = vmatprep.subr.mxu0 0.0
    %756 = vmatpush1.msra.mxu0 0.0
    %757 = vmatprep.subr.mxu0 0.0
    %758 = vmatpush1.msra.mxu0 0.0
    %759 = vmatprep.subr.mxu0 0.0
    %760 = vmatpush1.msra.mxu0 0.0
    %761 = vmatprep.subr.mxu0 0.0
    %762 = vmatpush1.msra.mxu0 0.0
    %763 = vmatprep.subr.mxu0 0.0
    %764 = vmatpush1.msra.mxu0 0.0
    %765 = vmatprep.subr.mxu0 0.0
    %766 = vmatpush1.msra.mxu0 0.0
    %767 = vmatprep.subr.mxu0 0.0
    %768 = vmatpush1.msra.mxu0 0.0
    %769 = vmatprep.subr.mxu0 0.0
    %770 = vmatpush1.msra.mxu0 0.0
    %771 = vmatprep.subr.mxu0 0.0
    %772 = vmatpush1.msra.mxu0 0.0
    %773 = vmatprep.subr.mxu0 0.0
    %774 = vmatpush1.msra.mxu0 0.0
    %775 = vmatprep.subr.mxu0 0.0
    %776 = vmatpush1.msra.mxu0 0.0
    %777 = vmatprep.subr.mxu0 0.0
    %778 = vmatpush1.msra.mxu0 0.0
    %779 = vmatprep.subr.mxu0 0.0
    %780 = vmatpush1.msra.mxu0 0.0
    %781 = vmatprep.subr.mxu0 0.0
    %782 = vmatpush1.msra.mxu0 0.0
    %783 = vmatprep.subr.mxu0 0.0
    %784 = vmatpush1.msra.mxu0 0.0
    %785 = vmatprep.subr.mxu0 0.0
    %786 = vmatpush1.msra.mxu0 0.0
    %787 = vmatprep.subr.mxu0 0.0
    %788 = vmatpush1.msra.mxu0 0.0
    %789 = vmatprep.subr.mxu0 0.0
    %790 = vmatpush1.msra.mxu0 0.0
    %791 = vmatprep.subr.mxu0 0.0
    %792 = vmatpush1.msra.mxu0 0.0
    %793 = vmatprep.subr.mxu0 0.0
    %794 = vmatpush1.msra.mxu0 0.0
    %795 = vmatprep.mubr.f32.mxu0 0.0
    %796 = vmatmul.mubr.f32.gmra.mrb[0].mxu0 %v729
    %v797 = vpop.f32.mrb[0].mxu0
    %v798 = vadd.f32 %v725, %v797
    %v799 = vpop.f32.mrb[0].mxu0
    %800 = vdwg.mxu0
    %v801 = vmax.f32 %v798, 0.0
    %v802 = vld [vmem:[%s12] sm:$0xff]
    %v803 = vld [vmem:[%s12 + $0x8] sm:$0xff]
    %v804 = vld [vmem:[%s12 + $0x10] sm:$0xff]
    %v805 = vld [vmem:[%s12 + $0x18] sm:$0xff]
    %v806 = vld [vmem:[%s12 + $0x20] sm:$0xff]
    %v807 = vld [vmem:[%s12 + $0x28] sm:$0xff]
    %v808 = vld [vmem:[%s12 + $0x30] sm:$0xff]
    %v809 = vld [vmem:[%s12 + $0x38] sm:$0xff]
    %v810 = vld [vmem:[%s13] sm:$0x3]
    %v812 = vlaneseq
    %v813 = vshrl.u32 %v812, 7
    %v814 = vsub.s32 0, %v813
    %v815 = vrot.slane %v810, %v814
    %v816 = vlaneseq
    %v817 = vshrl.u32 %v816, 7
    %v818 = vsub.s32 1, %v817
    %v819 = vrot.slane %v810, %v818
    %vm822 = vcmask 261120
    %v824 = vsel %vm822, %v801, 0
    %826 = vmatprep.subr.mxu0 %v803
    %827 = vmatpush1.msra.mxu0 %v802
    %828 = vmatprep.subr.mxu0 %v805
    %829 = vmatpush1.msra.mxu0 %v804
    %830 = vmatprep.subr.mxu0 %v807
    %831 = vmatpush1.msra.mxu0 %v806
    %832 = vmatprep.subr.mxu0 %v809
    %833 = vmatpush1.msra.mxu0 %v808
    %834 = vmatprep.subr.mxu0 0.0
    %835 = vmatpush1.msra.mxu0 0.0
    %836 = vmatprep.subr.mxu0 0.0
    %837 = vmatpush1.msra.mxu0 0.0
    %838 = vmatprep.subr.mxu0 0.0
    %839 = vmatpush1.msra.mxu0 0.0
    %840 = vmatprep.subr.mxu0 0.0
    %841 = vmatpush1.msra.mxu0 0.0
    %842 = vmatprep.subr.mxu0 0.0
    %843 = vmatpush1.msra.mxu0 0.0
    %844 = vmatprep.subr.mxu0 0.0
    %845 = vmatpush1.msra.mxu0 0.0
    %846 = vmatprep.subr.mxu0 0.0
    %847 = vmatpush1.msra.mxu0 0.0
    %848 = vmatprep.subr.mxu0 0.0
    %849 = vmatpush1.msra.mxu0 0.0
    %850 = vmatprep.subr.mxu0 0.0
    %851 = vmatpush1.msra.mxu0 0.0
    %852 = vmatprep.subr.mxu0 0.0
    %853 = vmatpush1.msra.mxu0 0.0
    %854 = vmatprep.subr.mxu0 0.0
    %855 = vmatpush1.msra.mxu0 0.0
    %856 = vmatprep.subr.mxu0 0.0
    %857 = vmatpush1.msra.mxu0 0.0
    %858 = vmatprep.subr.mxu0 0.0
    %859 = vmatpush1.msra.mxu0 0.0
    %860 = vmatprep.subr.mxu0 0.0
    %861 = vmatpush1.msra.mxu0 0.0
    %862 = vmatprep.subr.mxu0 0.0
    %863 = vmatpush1.msra.mxu0 0.0
    %864 = vmatprep.subr.mxu0 0.0
    %865 = vmatpush1.msra.mxu0 0.0
    %866 = vmatprep.subr.mxu0 0.0
    %867 = vmatpush1.msra.mxu0 0.0
    %868 = vmatprep.subr.mxu0 0.0
    %869 = vmatpush1.msra.mxu0 0.0
    %870 = vmatprep.subr.mxu0 0.0
    %871 = vmatpush1.msra.mxu0 0.0
    %872 = vmatprep.subr.mxu0 0.0
    %873 = vmatpush1.msra.mxu0 0.0
    %874 = vmatprep.subr.mxu0 0.0
    %875 = vmatpush1.msra.mxu0 0.0
    %876 = vmatprep.subr.mxu0 0.0
    %877 = vmatpush1.msra.mxu0 0.0
    %878 = vmatprep.subr.mxu0 0.0
    %879 = vmatpush1.msra.mxu0 0.0
    %880 = vmatprep.subr.mxu0 0.0
    %881 = vmatpush1.msra.mxu0 0.0
    %882 = vmatprep.subr.mxu0 0.0
    %883 = vmatpush1.msra.mxu0 0.0
    %884 = vmatprep.subr.mxu0 0.0
    %885 = vmatpush1.msra.mxu0 0.0
    %886 = vmatprep.subr.mxu0 0.0
    %887 = vmatpush1.msra.mxu0 0.0
    %888 = vmatprep.subr.mxu0 0.0
    %889 = vmatpush1.msra.mxu0 0.0
    %890 = vmatprep.mubr.f32.mxu0 0.0
    %891 = vmatmul.mubr.f32.gmra.mrb[0].mxu0 %v824
    %v892 = vpop.f32.mrb[0].mxu0
    %v893 = vadd.f32 %v815, %v892
    %v894 = vpop.f32.mrb[0].mxu0
    %v895 = vadd.f32 %v819, %v894
    %896 = vdwg.mxu0
    %v897 = vld [vmem:[#allocation4] sm:$0xff]
    %v898 = vld [vmem:[#allocation4 + $0x8] sm:$0xff]
    %v899 = vld [vmem:[#allocation4 + $0x10] sm:$0xff]
    %v900 = vld [vmem:[#allocation4 + $0x18] sm:$0xff]
    %v901 = vld [vmem:[#allocation4 + $0x20] sm:$0xff]
    %v902 = vld [vmem:[#allocation4 + $0x28] sm:$0xff]
    %v903 = vld [vmem:[#allocation4 + $0x30] sm:$0xff]
    %v904 = vld [vmem:[#allocation4 + $0x38] sm:$0xff]
    %v905 = vld [vmem:[%s15] sm:$0x3]
    %v907 = vlaneseq
    %v908 = vshrl.u32 %v907, 7
    %v909 = vsub.s32 0, %v908
    %v910 = vrot.slane %v905, %v909
    %v911 = vlaneseq
    %v912 = vshrl.u32 %v911, 7
    %v913 = vsub.s32 1, %v912
    %v914 = vrot.slane %v905, %v913
    %917 = vmatprep.subr.mxu0 %v898
    %918 = vmatpush1.msra.mxu0 %v897
    %919 = vmatprep.subr.mxu0 %v900
    %920 = vmatpush1.msra.mxu0 %v899
    %921 = vmatprep.subr.mxu0 %v902
    %922 = vmatpush1.msra.mxu0 %v901
    %923 = vmatprep.subr.mxu0 %v904
    %924 = vmatpush1.msra.mxu0 %v903
    %925 = vmatprep.subr.mxu0 0.0
    %926 = vmatpush1.msra.mxu0 0.0
    %927 = vmatprep.subr.mxu0 0.0
    %928 = vmatpush1.msra.mxu0 0.0
    %929 = vmatprep.subr.mxu0 0.0
    %930 = vmatpush1.msra.mxu0 0.0
    %931 = vmatprep.subr.mxu0 0.0
    %932 = vmatpush1.msra.mxu0 0.0
    %933 = vmatprep.subr.mxu0 0.0
    %934 = vmatpush1.msra.mxu0 0.0
    %935 = vmatprep.subr.mxu0 0.0
    %936 = vmatpush1.msra.mxu0 0.0
    %937 = vmatprep.subr.mxu0 0.0
    %938 = vmatpush1.msra.mxu0 0.0
    %939 = vmatprep.subr.mxu0 0.0
    %940 = vmatpush1.msra.mxu0 0.0
    %941 = vmatprep.subr.mxu0 0.0
    %942 = vmatpush1.msra.mxu0 0.0
    %943 = vmatprep.subr.mxu0 0.0
    %944 = vmatpush1.msra.mxu0 0.0
    %945 = vmatprep.subr.mxu0 0.0
    %946 = vmatpush1.msra.mxu0 0.0
    %947 = vmatprep.subr.mxu0 0.0
    %948 = vmatpush1.msra.mxu0 0.0
    %949 = vmatprep.subr.mxu0 0.0
    %950 = vmatpush1.msra.mxu0 0.0
    %951 = vmatprep.subr.mxu0 0.0
    %952 = vmatpush1.msra.mxu0 0.0
    %953 = vmatprep.subr.mxu0 0.0
    %954 = vmatpush1.msra.mxu0 0.0
    %955 = vmatprep.subr.mxu0 0.0
    %956 = vmatpush1.msra.mxu0 0.0
    %957 = vmatprep.subr.mxu0 0.0
    %958 = vmatpush1.msra.mxu0 0.0
    %959 = vmatprep.subr.mxu0 0.0
    %960 = vmatpush1.msra.mxu0 0.0
    %961 = vmatprep.subr.mxu0 0.0
    %962 = vmatpush1.msra.mxu0 0.0
    %963 = vmatprep.subr.mxu0 0.0
    %964 = vmatpush1.msra.mxu0 0.0
    %965 = vmatprep.subr.mxu0 0.0
    %966 = vmatpush1.msra.mxu0 0.0
    %967 = vmatprep.subr.mxu0 0.0
    %968 = vmatpush1.msra.mxu0 0.0
    %969 = vmatprep.subr.mxu0 0.0
    %970 = vmatpush1.msra.mxu0 0.0
    %971 = vmatprep.subr.mxu0 0.0
    %972 = vmatpush1.msra.mxu0 0.0
    %973 = vmatprep.subr.mxu0 0.0
    %974 = vmatpush1.msra.mxu0 0.0
    %975 = vmatprep.subr.mxu0 0.0
    %976 = vmatpush1.msra.mxu0 0.0
    %977 = vmatprep.subr.mxu0 0.0
    %978 = vmatpush1.msra.mxu0 0.0
    %979 = vmatprep.subr.mxu0 0.0
    %980 = vmatpush1.msra.mxu0 0.0
    %981 = vmatprep.mubr.f32.mxu0 0.0
    %982 = vmatmul.mubr.f32.gmra.mrb[0].mxu0 %v824
    %v983 = vpop.f32.mrb[0].mxu0
    %v984 = vadd.f32 %v910, %v983
    %v985 = vpop.f32.mrb[0].mxu0
    %v986 = vadd.f32 %v914, %v985
    %987 = vdwg.mxu0
    %vm988 = vcmp.gt.f32.partialorder %v984, 0.0
    %vm989 = vcmp.gt.f32.partialorder %v986, 0.0
    %v990 = vld [vmem:[%s2] sm:$0xf]
    %v993 = vunpack.c.l.s4 1983009808
    %v994 = vunpack.c.0.s8 %v993
    %v995 = vlaneseq
    %v996 = vshrl.u32 %v995, 7
    %v997 = vsub.s32 %v994, %v996
    %v998 = vrot.slane %v990, %v997
    %v999 = vcombine.high %v998, %v998
    %v1002 = vsel %vm988, %v893, %v998
    %v1003 = vsel %vm989, %v895, %v999
    %v1004 = vld [vmem:[#allocation7] sm:$0xff]
    %v1005 = vld [vmem:[#allocation7 + $0x8] sm:$0xff]
    %v1006 = vld [vmem:[#allocation7 + $0x10] sm:$0xff]
    %v1007 = vld [vmem:[#allocation7 + $0x18] sm:$0xff]
    %v1008 = vld [vmem:[#allocation7 + $0x20] sm:$0xff]
    %v1009 = vld [vmem:[#allocation7 + $0x28] sm:$0xff]
    %v1010 = vld [vmem:[#allocation7 + $0x30] sm:$0xff]
    %v1011 = vld [vmem:[#allocation7 + $0x38] sm:$0xff]
    %v1012 = vld [vmem:[#allocation7 + $0x40] sm:$0xff]
    %v1013 = vld [vmem:[#allocation7 + $0x48] sm:$0xff]
    %v1014 = vld [vmem:[#allocation7 + $0x50] sm:$0xff]
    %v1015 = vld [vmem:[#allocation7 + $0x58] sm:$0xff]
    %v1016 = vld [vmem:[#allocation7 + $0x60] sm:$0xff]
    %v1017 = vld [vmem:[#allocation7 + $0x68] sm:$0xff]
    %v1018 = vld [vmem:[#allocation7 + $0x70] sm:$0xff]
    %v1019 = vld [vmem:[#allocation7 + $0x78] sm:$0xff]
    %v1020 = vld [vmem:[#allocation7 + $0x80] sm:$0xff]
    %v1021 = vld [vmem:[#allocation7 + $0x88] sm:$0xff]
    %v1022 = vld [vmem:[#allocation7 + $0x90] sm:$0xff]
    %v1023 = vld [vmem:[#allocation7 + $0x98] sm:$0xff]
    %v1024 = vld [vmem:[#allocation7 + $0xa0] sm:$0xff]
    %v1025 = vld [vmem:[#allocation7 + $0xa8] sm:$0xff]
    %v1026 = vld [vmem:[#allocation7 + $0xb0] sm:$0xff]
    %v1027 = vld [vmem:[#allocation7 + $0xb8] sm:$0xff]
    %v1028 = vld [vmem:[#allocation7 + $0xc0] sm:$0xff]
    %v1029 = vld [vmem:[#allocation7 + $0xc8] sm:$0xff]
    %v1030 = vld [vmem:[#allocation7 + $0xd0] sm:$0xff]
    %v1031 = vld [vmem:[#allocation7 + $0xd8] sm:$0xff]
    %v1032 = vld [vmem:[#allocation7 + $0xe0] sm:$0xff]
    %v1033 = vld [vmem:[#allocation7 + $0xe8] sm:$0xff]
    %v1034 = vld [vmem:[#allocation7 + $0xf0] sm:$0xff]
    %v1035 = vld [vmem:[#allocation7 + $0xf8] sm:$0xff]
    %v1036 = vld [vmem:[#allocation7 + $0x100] sm:$0xff]
    %v1037 = vld [vmem:[#allocation7 + $0x108] sm:$0xff]
    %v1038 = vld [vmem:[#allocation7 + $0x110] sm:$0xff]
    %v1039 = vld [vmem:[#allocation7 + $0x118] sm:$0xff]
    %v1040 = vld [vmem:[#allocation7 + $0x120] sm:$0xff]
    %v1041 = vld [vmem:[#allocation7 + $0x128] sm:$0xff]
    %v1042 = vld [vmem:[#allocation7 + $0x130] sm:$0xff]
    %v1043 = vld [vmem:[#allocation7 + $0x138] sm:$0xff]
    %v1044 = vld [vmem:[#allocation7 + $0x140] sm:$0xff]
    %v1045 = vld [vmem:[#allocation7 + $0x148] sm:$0xff]
    %v1046 = vld [vmem:[#allocation7 + $0x150] sm:$0xff]
    %v1047 = vld [vmem:[#allocation7 + $0x158] sm:$0xff]
    %v1048 = vld [vmem:[#allocation7 + $0x160] sm:$0xff]
    %v1049 = vld [vmem:[#allocation7 + $0x168] sm:$0xff]
    %v1050 = vld [vmem:[#allocation7 + $0x170] sm:$0xff]
    %v1051 = vld [vmem:[#allocation7 + $0x178] sm:$0xff]
    %v1053 = vsel %vm480, %v986, 0
    %1055 = vmatprep.subr.mxu0 %v1005
    %1056 = vmatpush1.msra.mxu0 %v1004
    %1057 = vmatprep.subr.mxu0 %v1007
    %1058 = vmatpush1.msra.mxu0 %v1006
    %1059 = vmatprep.subr.mxu0 %v1009
    %1060 = vmatpush1.msra.mxu0 %v1008
    %1061 = vmatprep.subr.mxu0 %v1011
    %1062 = vmatpush1.msra.mxu0 %v1010
    %1063 = vmatprep.subr.mxu0 %v1013
    %1064 = vmatpush1.msra.mxu0 %v1012
    %1065 = vmatprep.subr.mxu0 %v1015
    %1066 = vmatpush1.msra.mxu0 %v1014
    %1067 = vmatprep.subr.mxu0 %v1017
    %1068 = vmatpush1.msra.mxu0 %v1016
    %1069 = vmatprep.subr.mxu0 %v1019
    %1070 = vmatpush1.msra.mxu0 %v1018
    %1071 = vmatprep.subr.mxu0 %v1021
    %1072 = vmatpush1.msra.mxu0 %v1020
    %1073 = vmatprep.subr.mxu0 %v1023
    %1074 = vmatpush1.msra.mxu0 %v1022
    %1075 = vmatprep.subr.mxu0 %v1025
    %1076 = vmatpush1.msra.mxu0 %v1024
    %1077 = vmatprep.subr.mxu0 %v1027
    %1078 = vmatpush1.msra.mxu0 %v1026
    %1079 = vmatprep.subr.mxu0 %v1029
    %1080 = vmatpush1.msra.mxu0 %v1028
    %1081 = vmatprep.subr.mxu0 %v1031
    %1082 = vmatpush1.msra.mxu0 %v1030
    %1083 = vmatprep.subr.mxu0 %v1033
    %1084 = vmatpush1.msra.mxu0 %v1032
    %1085 = vmatprep.subr.mxu0 %v1035
    %1086 = vmatpush1.msra.mxu0 %v1034
    %1087 = vmatprep.subr.mxu0 %v1037
    %1088 = vmatpush1.msra.mxu0 %v1036
    %1089 = vmatprep.subr.mxu0 %v1039
    %1090 = vmatpush1.msra.mxu0 %v1038
    %1091 = vmatprep.subr.mxu0 %v1041
    %1092 = vmatpush1.msra.mxu0 %v1040
    %1093 = vmatprep.subr.mxu0 %v1043
    %1094 = vmatpush1.msra.mxu0 %v1042
    %1095 = vmatprep.subr.mxu0 %v1045
    %1096 = vmatpush1.msra.mxu0 %v1044
    %1097 = vmatprep.subr.mxu0 %v1047
    %1098 = vmatpush1.msra.mxu0 %v1046
    %1099 = vmatprep.subr.mxu0 %v1049
    %1100 = vmatpush1.msra.mxu0 %v1048
    %1101 = vmatprep.subr.mxu0 %v1051
    %1102 = vmatpush1.msra.mxu0 %v1050
    %1103 = vmatprep.subr.mxu0 0.0
    %1104 = vmatpush1.msra.mxu0 0.0
    %1105 = vmatprep.subr.mxu0 0.0
    %1106 = vmatpush1.msra.mxu0 0.0
    %1107 = vmatprep.subr.mxu0 0.0
    %1108 = vmatpush1.msra.mxu0 0.0
    %1109 = vmatprep.subr.mxu0 0.0
    %1110 = vmatpush1.msra.mxu0 0.0
    %1111 = vmatprep.subr.mxu0 0.0
    %1112 = vmatpush1.msra.mxu0 0.0
    %1113 = vmatprep.subr.mxu0 0.0
    %1114 = vmatpush1.msra.mxu0 0.0
    %1115 = vmatprep.subr.mxu0 0.0
    %1116 = vmatpush1.msra.mxu0 0.0
    %1117 = vmatprep.subr.mxu0 0.0
    %1118 = vmatpush1.msra.mxu0 0.0
    %1119 = vmatprep.mubr.f32.mxu0 %v1053
    %1120 = vmatmul.mubr.f32.gmra.mrb[0].mxu0 %v984
    %v1121 = vpop.f32.mrb[0].mxu0
    %v1122 = vadd.f32 0.0, %v1121
    %v1123 = vpop.f32.mrb[0].mxu0
    %v1124 = vadd.f32 0.0, %v1123
    %1125 = vdwg.mxu0
    %v1128 = vcombine.low %v1122, %v1124
    %v1130 = vunpack.c.l.s4 1983009808
    %v1131 = vunpack.c.0.s8 %v1130
    %v1132 = vlaneseq
    %v1133 = vshrl.u32 %v1132, 7
    %v1134 = vsub.s32 %v1131, %v1133
    %v1135 = vrot.slane %v1128, %v1134
    %1137 = vst [vmem:[%s19] sm:$0xf] %v1135
    %v1138 = vld [vmem:[#allocation6] sm:$0xff]
    %v1139 = vld [vmem:[#allocation6 + $0x8] sm:$0xff]
    %v1140 = vld [vmem:[#allocation6 + $0x10] sm:$0xff]
    %v1141 = vld [vmem:[#allocation6 + $0x18] sm:$0xff]
    %v1142 = vld [vmem:[#allocation6 + $0x20] sm:$0xff]
    %v1143 = vld [vmem:[#allocation6 + $0x28] sm:$0xff]
    %v1144 = vld [vmem:[#allocation6 + $0x30] sm:$0xff]
    %v1145 = vld [vmem:[#allocation6 + $0x38] sm:$0xff]
    %v1146 = vld [vmem:[#allocation6 + $0x40] sm:$0xff]
    %v1147 = vld [vmem:[#allocation6 + $0x48] sm:$0xff]
    %v1148 = vld [vmem:[#allocation6 + $0x50] sm:$0xff]
    %v1149 = vld [vmem:[#allocation6 + $0x58] sm:$0xff]
    %v1150 = vld [vmem:[#allocation6 + $0x60] sm:$0xff]
    %v1151 = vld [vmem:[#allocation6 + $0x68] sm:$0xff]
    %v1152 = vld [vmem:[#allocation6 + $0x70] sm:$0xff]
    %v1153 = vld [vmem:[#allocation6 + $0x78] sm:$0xff]
    %v1154 = vld [vmem:[#allocation6 + $0x80] sm:$0xff]
    %v1155 = vld [vmem:[#allocation6 + $0x88] sm:$0xff]
    %v1156 = vld [vmem:[#allocation6 + $0x90] sm:$0xff]
    %v1157 = vld [vmem:[#allocation6 + $0x98] sm:$0xff]
    %v1158 = vld [vmem:[#allocation6 + $0xa0] sm:$0xff]
    %v1159 = vld [vmem:[#allocation6 + $0xa8] sm:$0xff]
    %v1160 = vld [vmem:[#allocation6 + $0xb0] sm:$0xff]
    %v1161 = vld [vmem:[#allocation6 + $0xb8] sm:$0xff]
    %v1162 = vld [vmem:[#allocation6 + $0xc0] sm:$0xff]
    %v1163 = vld [vmem:[#allocation6 + $0xc8] sm:$0xff]
    %v1164 = vld [vmem:[#allocation6 + $0xd0] sm:$0xff]
    %v1165 = vld [vmem:[#allocation6 + $0xd8] sm:$0xff]
    %v1166 = vld [vmem:[#allocation6 + $0xe0] sm:$0xff]
    %v1167 = vld [vmem:[#allocation6 + $0xe8] sm:$0xff]
    %v1168 = vld [vmem:[#allocation6 + $0xf0] sm:$0xff]
    %v1169 = vld [vmem:[#allocation6 + $0xf8] sm:$0xff]
    %v1170 = vld [vmem:[#allocation6 + $0x100] sm:$0xff]
    %v1171 = vld [vmem:[#allocation6 + $0x108] sm:$0xff]
    %v1172 = vld [vmem:[#allocation6 + $0x110] sm:$0xff]
    %v1173 = vld [vmem:[#allocation6 + $0x118] sm:$0xff]
    %v1174 = vld [vmem:[#allocation6 + $0x120] sm:$0xff]
    %v1175 = vld [vmem:[#allocation6 + $0x128] sm:$0xff]
    %v1176 = vld [vmem:[#allocation6 + $0x130] sm:$0xff]
    %v1177 = vld [vmem:[#allocation6 + $0x138] sm:$0xff]
    %v1178 = vld [vmem:[#allocation6 + $0x140] sm:$0xff]
    %v1179 = vld [vmem:[#allocation6 + $0x148] sm:$0xff]
    %v1180 = vld [vmem:[#allocation6 + $0x150] sm:$0xff]
    %v1181 = vld [vmem:[#allocation6 + $0x158] sm:$0xff]
    %v1182 = vld [vmem:[#allocation6 + $0x160] sm:$0xff]
    %v1183 = vld [vmem:[#allocation6 + $0x168] sm:$0xff]
    %v1184 = vld [vmem:[#allocation6 + $0x170] sm:$0xff]
    %v1185 = vld [vmem:[#allocation6 + $0x178] sm:$0xff]
    %v1186 = vld [vmem:[#allocation6 + $0x180] sm:$0xff]
    %v1187 = vld [vmem:[#allocation6 + $0x188] sm:$0xff]
    %v1188 = vld [vmem:[#allocation6 + $0x190] sm:$0xff]
    %v1189 = vld [vmem:[#allocation6 + $0x198] sm:$0xff]
    %v1190 = vld [vmem:[#allocation6 + $0x1a0] sm:$0xff]
    %v1191 = vld [vmem:[#allocation6 + $0x1a8] sm:$0xff]
    %v1192 = vld [vmem:[#allocation6 + $0x1b0] sm:$0xff]
    %v1193 = vld [vmem:[#allocation6 + $0x1b8] sm:$0xff]
    %v1194 = vld [vmem:[#allocation6 + $0x1c0] sm:$0xff]
    %v1195 = vld [vmem:[#allocation6 + $0x1c8] sm:$0xff]
    %v1196 = vld [vmem:[#allocation6 + $0x1d0] sm:$0xff]
    %v1197 = vld [vmem:[#allocation6 + $0x1d8] sm:$0xff]
    %v1198 = vld [vmem:[#allocation6 + $0x1e0] sm:$0xff]
    %v1199 = vld [vmem:[#allocation6 + $0x1e8] sm:$0xff]
    %v1200 = vld [vmem:[#allocation6 + $0x1f0] sm:$0xff]
    %v1201 = vld [vmem:[#allocation6 + $0x1f8] sm:$0xff]
    %v1202 = vld [vmem:[#allocation6 + $0x200] sm:$0xff]
    %v1203 = vld [vmem:[#allocation6 + $0x208] sm:$0xff]
    %v1204 = vld [vmem:[#allocation6 + $0x210] sm:$0xff]
    %v1205 = vld [vmem:[#allocation6 + $0x218] sm:$0xff]
    %v1206 = vld [vmem:[#allocation6 + $0x220] sm:$0xff]
    %v1207 = vld [vmem:[#allocation6 + $0x228] sm:$0xff]
    %v1208 = vld [vmem:[#allocation6 + $0x230] sm:$0xff]
    %v1209 = vld [vmem:[#allocation6 + $0x238] sm:$0xff]
    %v1210 = vld [vmem:[#allocation6 + $0x240] sm:$0xff]
    %v1211 = vld [vmem:[#allocation6 + $0x248] sm:$0xff]
    %v1212 = vld [vmem:[#allocation6 + $0x250] sm:$0xff]
    %v1213 = vld [vmem:[#allocation6 + $0x258] sm:$0xff]
    %v1214 = vld [vmem:[#allocation6 + $0x260] sm:$0xff]
    %v1215 = vld [vmem:[#allocation6 + $0x268] sm:$0xff]
    %v1216 = vld [vmem:[#allocation6 + $0x270] sm:$0xff]
    %v1217 = vld [vmem:[#allocation6 + $0x278] sm:$0xff]
    %v1218 = vld [vmem:[#allocation6 + $0x280] sm:$0xff]
    %v1219 = vld [vmem:[#allocation6 + $0x288] sm:$0xff]
    %v1220 = vld [vmem:[#allocation6 + $0x290] sm:$0xff]
    %v1221 = vld [vmem:[#allocation6 + $0x298] sm:$0xff]
    %v1222 = vld [vmem:[#allocation6 + $0x2a0] sm:$0xff]
    %v1223 = vld [vmem:[#allocation6 + $0x2a8] sm:$0xff]
    %v1224 = vld [vmem:[#allocation6 + $0x2b0] sm:$0xff]
    %v1225 = vld [vmem:[#allocation6 + $0x2b8] sm:$0xff]
    %v1226 = vld [vmem:[#allocation6 + $0x2c0] sm:$0xff]
    %v1227 = vld [vmem:[#allocation6 + $0x2c8] sm:$0xff]
    %v1228 = vld [vmem:[#allocation6 + $0x2d0] sm:$0xff]
    %v1229 = vld [vmem:[#allocation6 + $0x2d8] sm:$0xff]
    %v1230 = vld [vmem:[#allocation6 + $0x2e0] sm:$0xff]
    %v1231 = vld [vmem:[#allocation6 + $0x2e8] sm:$0xff]
    %v1232 = vld [vmem:[#allocation6 + $0x2f0] sm:$0xff]
    %v1233 = vld [vmem:[#allocation6 + $0x2f8] sm:$0xff]
    %v1234 = vld [vmem:[#allocation6 + $0x300] sm:$0xff]
    %v1235 = vld [vmem:[#allocation6 + $0x308] sm:$0xff]
    %v1236 = vld [vmem:[#allocation6 + $0x310] sm:$0xff]
    %v1237 = vld [vmem:[#allocation6 + $0x318] sm:$0xff]
    %v1238 = vld [vmem:[#allocation6 + $0x320] sm:$0xff]
    %v1239 = vld [vmem:[#allocation6 + $0x328] sm:$0xff]
    %v1240 = vld [vmem:[#allocation6 + $0x330] sm:$0xff]
    %v1241 = vld [vmem:[#allocation6 + $0x338] sm:$0xff]
    %v1242 = vld [vmem:[#allocation6 + $0x340] sm:$0xff]
    %v1243 = vld [vmem:[#allocation6 + $0x348] sm:$0xff]
    %v1244 = vld [vmem:[#allocation6 + $0x350] sm:$0xff]
    %v1245 = vld [vmem:[#allocation6 + $0x358] sm:$0xff]
    %v1246 = vld [vmem:[#allocation6 + $0x360] sm:$0xff]
    %v1247 = vld [vmem:[#allocation6 + $0x368] sm:$0xff]
    %v1248 = vld [vmem:[#allocation6 + $0x370] sm:$0xff]
    %v1249 = vld [vmem:[#allocation6 + $0x378] sm:$0xff]
    %v1250 = vld [vmem:[#allocation6 + $0x380] sm:$0xff]
    %v1251 = vld [vmem:[#allocation6 + $0x388] sm:$0xff]
    %v1252 = vld [vmem:[#allocation6 + $0x390] sm:$0xff]
    %v1253 = vld [vmem:[#allocation6 + $0x398] sm:$0xff]
    %v1254 = vld [vmem:[#allocation6 + $0x3a0] sm:$0xff]
    %v1255 = vld [vmem:[#allocation6 + $0x3a8] sm:$0xff]
    %v1256 = vld [vmem:[#allocation6 + $0x3b0] sm:$0xff]
    %v1257 = vld [vmem:[#allocation6 + $0x3b8] sm:$0xff]
    %v1258 = vld [vmem:[#allocation6 + $0x3c0] sm:$0xff]
    %v1259 = vld [vmem:[#allocation6 + $0x3c8] sm:$0xff]
    %v1260 = vld [vmem:[#allocation6 + $0x3d0] sm:$0xff]
    %v1261 = vld [vmem:[#allocation6 + $0x3d8] sm:$0xff]
    %v1262 = vld [vmem:[#allocation6 + $0x3e0] sm:$0xff]
    %v1263 = vld [vmem:[#allocation6 + $0x3e8] sm:$0xff]
    %v1264 = vld [vmem:[#allocation6 + $0x3f0] sm:$0xff]
    %v1265 = vld [vmem:[#allocation6 + $0x3f8] sm:$0xff]
    %v1266 = vld [vmem:[#allocation6 + $0x400] sm:$0xff]
    %v1267 = vld [vmem:[#allocation6 + $0x408] sm:$0xff]
    %v1268 = vld [vmem:[#allocation6 + $0x410] sm:$0xff]
    %v1269 = vld [vmem:[#allocation6 + $0x418] sm:$0xff]
    %v1270 = vld [vmem:[#allocation6 + $0x420] sm:$0xff]
    %v1271 = vld [vmem:[#allocation6 + $0x428] sm:$0xff]
    %v1272 = vld [vmem:[#allocation6 + $0x430] sm:$0xff]
    %v1273 = vld [vmem:[#allocation6 + $0x438] sm:$0xff]
    %v1274 = vld [vmem:[#allocation6 + $0x440] sm:$0xff]
    %v1275 = vld [vmem:[#allocation6 + $0x448] sm:$0xff]
    %v1276 = vld [vmem:[#allocation6 + $0x450] sm:$0xff]
    %v1277 = vld [vmem:[#allocation6 + $0x458] sm:$0xff]
    %v1278 = vld [vmem:[#allocation6 + $0x460] sm:$0xff]
    %v1279 = vld [vmem:[#allocation6 + $0x468] sm:$0xff]
    %v1280 = vld [vmem:[#allocation6 + $0x470] sm:$0xff]
    %v1281 = vld [vmem:[#allocation6 + $0x478] sm:$0xff]
    %v1283 = vsel %vm480, %v1003, 0
    %1285 = vmatprep.subr.mxu0 %v1139
    %1286 = vmatpush1.msra.mxu0 %v1138
    %1287 = vmatprep.subr.mxu0 %v1145
    %1288 = vmatpush1.msra.mxu0 %v1144
    %1289 = vmatprep.subr.mxu0 %v1151
    %1290 = vmatpush1.msra.mxu0 %v1150
    %1291 = vmatprep.subr.mxu0 %v1157
    %1292 = vmatpush1.msra.mxu0 %v1156
    %1293 = vmatprep.subr.mxu0 %v1163
    %1294 = vmatpush1.msra.mxu0 %v1162
    %1295 = vmatprep.subr.mxu0 %v1169
    %1296 = vmatpush1.msra.mxu0 %v1168
    %1297 = vmatprep.subr.mxu0 %v1175
    %1298 = vmatpush1.msra.mxu0 %v1174
    %1299 = vmatprep.subr.mxu0 %v1181
    %1300 = vmatpush1.msra.mxu0 %v1180
    %1301 = vmatprep.subr.mxu0 %v1187
    %1302 = vmatpush1.msra.mxu0 %v1186
    %1303 = vmatprep.subr.mxu0 %v1193
    %1304 = vmatpush1.msra.mxu0 %v1192
    %1305 = vmatprep.subr.mxu0 %v1199
    %1306 = vmatpush1.msra.mxu0 %v1198
    %1307 = vmatprep.subr.mxu0 %v1205
    %1308 = vmatpush1.msra.mxu0 %v1204
    %1309 = vmatprep.subr.mxu0 %v1211
    %1310 = vmatpush1.msra.mxu0 %v1210
    %1311 = vmatprep.subr.mxu0 %v1217
    %1312 = vmatpush1.msra.mxu0 %v1216
    %1313 = vmatprep.subr.mxu0 %v1223
    %1314 = vmatpush1.msra.mxu0 %v1222
    %1315 = vmatprep.subr.mxu0 %v1229
    %1316 = vmatpush1.msra.mxu0 %v1228
    %1317 = vmatprep.subr.mxu0 %v1235
    %1318 = vmatpush1.msra.mxu0 %v1234
    %1319 = vmatprep.subr.mxu0 %v1241
    %1320 = vmatpush1.msra.mxu0 %v1240
    %1321 = vmatprep.subr.mxu0 %v1247
    %1322 = vmatpush1.msra.mxu0 %v1246
    %1323 = vmatprep.subr.mxu0 %v1253
    %1324 = vmatpush1.msra.mxu0 %v1252
    %1325 = vmatprep.subr.mxu0 %v1259
    %1326 = vmatpush1.msra.mxu0 %v1258
    %1327 = vmatprep.subr.mxu0 %v1265
    %1328 = vmatpush1.msra.mxu0 %v1264
    %1329 = vmatprep.subr.mxu0 %v1271
    %1330 = vmatpush1.msra.mxu0 %v1270
    %1331 = vmatprep.subr.mxu0 %v1277
    %1332 = vmatpush1.msra.mxu0 %v1276
    %1333 = vmatprep.subr.mxu0 0.0
    %1334 = vmatpush1.msra.mxu0 0.0
    %1335 = vmatprep.subr.mxu0 0.0
    %1336 = vmatpush1.msra.mxu0 0.0
    %1337 = vmatprep.subr.mxu0 0.0
    %1338 = vmatpush1.msra.mxu0 0.0
    %1339 = vmatprep.subr.mxu0 0.0
    %1340 = vmatpush1.msra.mxu0 0.0
    %1341 = vmatprep.subr.mxu0 0.0
    %1342 = vmatpush1.msra.mxu0 0.0
    %1343 = vmatprep.subr.mxu0 0.0
    %1344 = vmatpush1.msra.mxu0 0.0
    %1345 = vmatprep.subr.mxu0 0.0
    %1346 = vmatpush1.msra.mxu0 0.0
    %1347 = vmatprep.subr.mxu0 0.0
    %1348 = vmatpush1.msra.mxu0 0.0
    %1349 = vmatprep.mubr.f32.mxu0 %v1283
    %1350 = vmatmul.mubr.f32.gmra.mrb[0].mxu0 %v1002
    %v1351 = vpop.f32.mrb[0].mxu0
    %v1352 = vadd.f32 0.0, %v1351
    %v1353 = vpop.f32.mrb[0].mxu0
    %v1354 = vadd.f32 0.0, %v1353
    %1355 = vdwg.mxu0
    %1356 = vmatprep.subr.mxu0 %v1141
    %1357 = vmatpush1.msra.mxu0 %v1140
    %1358 = vmatprep.subr.mxu0 %v1147
    %1359 = vmatpush1.msra.mxu0 %v1146
    %1360 = vmatprep.subr.mxu0 %v1153
    %1361 = vmatpush1.msra.mxu0 %v1152
    %1362 = vmatprep.subr.mxu0 %v1159
    %1363 = vmatpush1.msra.mxu0 %v1158
    %1364 = vmatprep.subr.mxu0 %v1165
    %1365 = vmatpush1.msra.mxu0 %v1164
    %1366 = vmatprep.subr.mxu0 %v1171
    %1367 = vmatpush1.msra.mxu0 %v1170
    %1368 = vmatprep.subr.mxu0 %v1177
    %1369 = vmatpush1.msra.mxu0 %v1176
    %1370 = vmatprep.subr.mxu0 %v1183
    %1371 = vmatpush1.msra.mxu0 %v1182
    %1372 = vmatprep.subr.mxu0 %v1189
    %1373 = vmatpush1.msra.mxu0 %v1188
    %1374 = vmatprep.subr.mxu0 %v1195
    %1375 = vmatpush1.msra.mxu0 %v1194
    %1376 = vmatprep.subr.mxu0 %v1201
    %1377 = vmatpush1.msra.mxu0 %v1200
    %1378 = vmatprep.subr.mxu0 %v1207
    %1379 = vmatpush1.msra.mxu0 %v1206
    %1380 = vmatprep.subr.mxu0 %v1213
    %1381 = vmatpush1.msra.mxu0 %v1212
    %1382 = vmatprep.subr.mxu0 %v1219
    %1383 = vmatpush1.msra.mxu0 %v1218
    %1384 = vmatprep.subr.mxu0 %v1225
    %1385 = vmatpush1.msra.mxu0 %v1224
    %1386 = vmatprep.subr.mxu0 %v1231
    %1387 = vmatpush1.msra.mxu0 %v1230
    %1388 = vmatprep.subr.mxu0 %v1237
    %1389 = vmatpush1.msra.mxu0 %v1236
    %1390 = vmatprep.subr.mxu0 %v1243
    %1391 = vmatpush1.msra.mxu0 %v1242
    %1392 = vmatprep.subr.mxu0 %v1249
    %1393 = vmatpush1.msra.mxu0 %v1248
    %1394 = vmatprep.subr.mxu0 %v1255
    %1395 = vmatpush1.msra.mxu0 %v1254
    %1396 = vmatprep.subr.mxu0 %v1261
    %1397 = vmatpush1.msra.mxu0 %v1260
    %1398 = vmatprep.subr.mxu0 %v1267
    %1399 = vmatpush1.msra.mxu0 %v1266
    %1400 = vmatprep.subr.mxu0 %v1273
    %1401 = vmatpush1.msra.mxu0 %v1272
    %1402 = vmatprep.subr.mxu0 %v1279
    %1403 = vmatpush1.msra.mxu0 %v1278
    %1404 = vmatprep.subr.mxu0 0.0
    %1405 = vmatpush1.msra.mxu0 0.0
    %1406 = vmatprep.subr.mxu0 0.0
    %1407 = vmatpush1.msra.mxu0 0.0
    %1408 = vmatprep.subr.mxu0 0.0
    %1409 = vmatpush1.msra.mxu0 0.0
    %1410 = vmatprep.subr.mxu0 0.0
    %1411 = vmatpush1.msra.mxu0 0.0
    %1412 = vmatprep.subr.mxu0 0.0
    %1413 = vmatpush1.msra.mxu0 0.0
    %1414 = vmatprep.subr.mxu0 0.0
    %1415 = vmatpush1.msra.mxu0 0.0
    %1416 = vmatprep.subr.mxu0 0.0
    %1417 = vmatpush1.msra.mxu0 0.0
    %1418 = vmatprep.subr.mxu0 0.0
    %1419 = vmatpush1.msra.mxu0 0.0
    %1420 = vmatprep.mubr.f32.mxu0 %v1283
    %1421 = vmatmul.mubr.f32.gmra.mrb[0].mxu0 %v1002
    %v1422 = vpop.f32.mrb[0].mxu0
    %v1423 = vadd.f32 0.0, %v1422
    %v1424 = vpop.f32.mrb[0].mxu0
    %v1425 = vadd.f32 0.0, %v1424
    %1426 = vdwg.mxu0
    %1427 = vmatprep.subr.mxu0 %v1143
    %1428 = vmatpush1.msra.mxu0 %v1142
    %1429 = vmatprep.subr.mxu0 %v1149
    %1430 = vmatpush1.msra.mxu0 %v1148
    %1431 = vmatprep.subr.mxu0 %v1155
    %1432 = vmatpush1.msra.mxu0 %v1154
    %1433 = vmatprep.subr.mxu0 %v1161
    %1434 = vmatpush1.msra.mxu0 %v1160
    %1435 = vmatprep.subr.mxu0 %v1167
    %1436 = vmatpush1.msra.mxu0 %v1166
    %1437 = vmatprep.subr.mxu0 %v1173
    %1438 = vmatpush1.msra.mxu0 %v1172
    %1439 = vmatprep.subr.mxu0 %v1179
    %1440 = vmatpush1.msra.mxu0 %v1178
    %1441 = vmatprep.subr.mxu0 %v1185
    %1442 = vmatpush1.msra.mxu0 %v1184
    %1443 = vmatprep.subr.mxu0 %v1191
    %1444 = vmatpush1.msra.mxu0 %v1190
    %1445 = vmatprep.subr.mxu0 %v1197
    %1446 = vmatpush1.msra.mxu0 %v1196
    %1447 = vmatprep.subr.mxu0 %v1203
    %1448 = vmatpush1.msra.mxu0 %v1202
    %1449 = vmatprep.subr.mxu0 %v1209
    %1450 = vmatpush1.msra.mxu0 %v1208
    %1451 = vmatprep.subr.mxu0 %v1215
    %1452 = vmatpush1.msra.mxu0 %v1214
    %1453 = vmatprep.subr.mxu0 %v1221
    %1454 = vmatpush1.msra.mxu0 %v1220
    %1455 = vmatprep.subr.mxu0 %v1227
    %1456 = vmatpush1.msra.mxu0 %v1226
    %1457 = vmatprep.subr.mxu0 %v1233
    %1458 = vmatpush1.msra.mxu0 %v1232
    %1459 = vmatprep.subr.mxu0 %v1239
    %1460 = vmatpush1.msra.mxu0 %v1238
    %1461 = vmatprep.subr.mxu0 %v1245
    %1462 = vmatpush1.msra.mxu0 %v1244
    %1463 = vmatprep.subr.mxu0 %v1251
    %1464 = vmatpush1.msra.mxu0 %v1250
    %1465 = vmatprep.subr.mxu0 %v1257
    %1466 = vmatpush1.msra.mxu0 %v1256
    %1467 = vmatprep.subr.mxu0 %v1263
    %1468 = vmatpush1.msra.mxu0 %v1262
    %1469 = vmatprep.subr.mxu0 %v1269
    %1470 = vmatpush1.msra.mxu0 %v1268
    %1471 = vmatprep.subr.mxu0 %v1275
    %1472 = vmatpush1.msra.mxu0 %v1274
    %1473 = vmatprep.subr.mxu0 %v1281
    %1474 = vmatpush1.msra.mxu0 %v1280
    %1475 = vmatprep.subr.mxu0 0.0
    %1476 = vmatpush1.msra.mxu0 0.0
    %1477 = vmatprep.subr.mxu0 0.0
    %1478 = vmatpush1.msra.mxu0 0.0
    %1479 = vmatprep.subr.mxu0 0.0
    %1480 = vmatpush1.msra.mxu0 0.0
    %1481 = vmatprep.subr.mxu0 0.0
    %1482 = vmatpush1.msra.mxu0 0.0
    %1483 = vmatprep.subr.mxu0 0.0
    %1484 = vmatpush1.msra.mxu0 0.0
    %1485 = vmatprep.subr.mxu0 0.0
    %1486 = vmatpush1.msra.mxu0 0.0
    %1487 = vmatprep.subr.mxu0 0.0
    %1488 = vmatpush1.msra.mxu0 0.0
    %1489 = vmatprep.subr.mxu0 0.0
    %1490 = vmatpush1.msra.mxu0 0.0
    %1491 = vmatprep.mubr.f32.mxu0 %v1283
    %1492 = vmatmul.mubr.f32.gmra.mrb[0].mxu0 %v1002
    %v1493 = vpop.f32.mrb[0].mxu0
    %v1494 = vadd.f32 0.0, %v1493
    %v1495 = vpop.f32.mrb[0].mxu0
    %v1496 = vadd.f32 0.0, %v1495
    %1497 = vdwg.mxu0
    %v1504 = vcombine.low %v1352, %v1354
    %v1505 = vcombine.low %v1423, %v1425
    %v1507 = vunpack.c.l.s4 1983009808
    %v1508 = vunpack.c.0.s8 %v1507
    %v1509 = vlaneseq
    %v1510 = vshrl.u32 %v1509, 7
    %v1511 = vsub.s32 %v1508, %v1510
    %v1512 = vrot.slane %v1504, %v1511
    %v1514 = vunpack.c.l.s4 1983009808
    %v1515 = vunpack.c.0.s8 %v1514
    %v1516 = vlaneseq
    %v1517 = vshrl.u32 %v1516, 7
    %v1518 = vsub.s32 %v1515, %v1517
    %v1519 = vrot.slane %v1505, %v1518
    %v1520 = vcombine.low %v1512, %v1519
    %v1521 = vcombine.low %v1494, %v1496
    %v1523 = vunpack.c.l.s4 1983009808
    %v1524 = vunpack.c.0.s8 %v1523
    %v1525 = vlaneseq
    %v1526 = vshrl.u32 %v1525, 7
    %v1527 = vsub.s32 %v1524, %v1526
    %v1528 = vrot.slane %v1521, %v1527
    %1531 = vst [vmem:[%s18] sm:$0xff] %v1520
    %1532 = vst [vmem:[%s18 + $0x8] sm:$0xf] %v1528
    // Predicated region
    $region90: #{_lambda_.1} parent=1 // pred_check
      _
    $region91: #{_lambda_.1} parent=1 // pred_check_branch
      %1534 = sbr.rel (0) target = $region93
    $region92: #{_lambda_.1} parent=1 // pred_region
      _
    $region93: #{_lambda_.1} parent=1 // pred_fallthru
      _
    // Predicated region
    $region94: #{_lambda_.1} parent=1 // pred_check
      _
    $region95: #{_lambda_.1} parent=1 // pred_check_branch
      %1536 = sbr.rel (0) target = $region97
    $region96: #{_lambda_.1} parent=1 // pred_region
      _
    $region97: #{_lambda_.1} parent=1 // pred_fallthru
      _
    // Predicated region
    $region98: #{_lambda_.1} parent=1 // pred_check
      _
    $region99: #{_lambda_.1} parent=1 // pred_check_branch
      %1538 = sbr.rel (0) target = $region101
    $region100: #{_lambda_.1} parent=1 // pred_region
      _
    $region101: #{_lambda_.1} parent=1 // pred_fallthru
      _
    // Predicated region
    $region102: #{_lambda_.1} parent=1 // pred_check
      _
    $region103: #{_lambda_.1} parent=1 // pred_check_branch
      %1540 = sbr.rel (0) target = $region105
    $region104: #{_lambda_.1} parent=1 // pred_region
      _
    $region105: #{_lambda_.1} parent=1 // pred_fallthru
      _
    %1541 = vsyncpa [#allocation3], 1
    %1542 = vsyncpa [#allocation5], 1
    %1543 = vsyncpa [#allocation8], 1

</llo_original>
